<compile_context>
chip_gen: v6e
topology: v6e:2x2x1
jax: 0.10.0
libtpu: 0.0.40
codegen_flags: <defaults>
</compile_context>

<pallas_src>
import functools
import math

import jax
import jax.numpy as jnp
from jax.experimental import pallas as pl
from jax.experimental.pallas import tpu as pltpu


# ----------------------------- Pallas kernel --------------------------------

def _encoder_kernel(
        x_ref, kbias_ref,
        ln_emb_g_ref, ln_emb_b_ref, ln_fin_g_ref, ln_fin_b_ref,
        ln1_g_ref, ln1_b_ref,
        q_w_ref, q_b_ref, k_w_ref, k_b_ref, v_w_ref, v_b_ref,
        o_w_ref, o_b_ref,
        ln2_g_ref, ln2_b_ref,
        fc1_w_ref, fc1_b_ref, fc2_w_ref, fc2_b_ref,
        out_ref,
        x_scr, qh_scr, kh_scr, vh_scr, ao_scr,
        *, num_layers, num_heads, head_dim):
    f32 = jnp.float32
    bf16 = jnp.bfloat16
    l = pl.program_id(1)                    # layer index (grid axis 1, "arbitrary")
    D = head_dim

    def layer_norm(x, g_ref, b_ref):
        mu = jnp.mean(x, axis=-1, keepdims=True)
        xc = x - mu
        var = jnp.mean(xc * xc, axis=-1, keepdims=True)
        return xc * jax.lax.rsqrt(var + 1e-5) * g_ref[...] + b_ref[...]

    def mm_nt(a16, w16):
        # a[M, K] . w[N, K] -> [M, N]  (contraction on last dims; no transposes)
        return jax.lax.dot_general(
            a16, w16, dimension_numbers=(((1,), (1,)), ((), ())),
            preferred_element_type=f32)

    # ---- first grid step of this batch row: embedding LayerNorm ----
    @pl.when(l == 0)
    def _():
        x_scr[...] = layer_norm(x_ref[...].astype(f32), ln_emb_g_ref, ln_emb_b_ref)
        # dropout omitted (eval mode)

    x = x_scr[...]                           # (S, H) fp32, VMEM-resident carry

    # ---- self-attention block (pre-LN); LoRA folded into q_w / v_w on host ----
    h16 = layer_norm(x, ln1_g_ref, ln1_b_ref).astype(bf16)     # single bf16 cast
    q = mm_nt(h16, q_w_ref[...]) + q_b_ref[...]                 # (S, H) f32
    k = mm_nt(h16, k_w_ref[...]) + k_b_ref[...]
    v = mm_nt(h16, v_w_ref[...]) + v_b_ref[...]

    # head split: cheap static VMEM stores (no tiny K=8 matmuls)
    for hd in range(num_heads):
        sl = slice(hd * D, (hd + 1) * D)
        qh_scr[hd] = q[:, sl]
        kh_scr[hd] = k[:, sl]
        vh_scr[hd] = v[:, sl]

    qh = qh_scr[...].astype(bf16)            # (NH, S, D)
    kh = kh_scr[...].astype(bf16)
    vh = vh_scr[...].astype(bf16)

    s = jnp.einsum("hqd,hkd->hqk", qh, kh, preferred_element_type=f32)  # (NH, S, S)
    s = s * (D ** -0.5) + kbias_ref[...][None]       # scale fp32 scores; key-pad bias
    s = s - jnp.max(s, axis=-1, keepdims=True)
    p = jnp.exp(s)
    p = p * pl.reciprocal(jnp.sum(p, axis=-1, keepdims=True), approx=True)
    o = jnp.einsum("hqk,hkd->hqd", p.astype(bf16), vh,
                   preferred_element_type=f32)        # (NH, S, D)

    # head merge back onto the lane axis, then ONE out-projection matmul
    for hd in range(num_heads):
        ao_scr[:, hd * D:(hd + 1) * D] = o[hd]
    attn = mm_nt(ao_scr[...].astype(bf16), o_w_ref[...]) + o_b_ref[...]
    x = x + attn

    # ---- FFN block (pre-LN) ----
    h16 = layer_norm(x, ln2_g_ref, ln2_b_ref).astype(bf16)
    f = mm_nt(h16, fc1_w_ref[...]) + fc1_b_ref[...]
    # TODO(synk): HF mBART uses exact erf-GELU; tanh approximation used here
    # (EUP-native, guaranteed Mosaic lowering).
    f = jax.nn.gelu(f, approximate=True)
    f = mm_nt(f.astype(bf16), fc2_w_ref[...]) + fc2_b_ref[...]
    x = x + f

    x_scr[...] = x                           # carry to next layer grid step

    # ---- last grid step of this batch row: final LayerNorm + writeback ----
    @pl.when(l == num_layers - 1)
    def _():
        out_ref[...] = layer_norm(x, ln_fin_g_ref, ln_fin_b_ref).astype(out_ref.dtype)


# ----------------------------- Model (config / params) ----------------------

class Config:
    vocab = 100
    max_pos = 64
    hidden = 32
    num_heads = 4
    ffn = 64
    num_layers = 2
    lora_r = 4
    lora_alpha = 8
    pos_offset = 2            # MBartLearnedPositionalEmbedding offset


CFG = Config()


def init_params(key, cfg):
    def nrm(k, shape, std=0.02):
        return jax.random.normal(k, shape, dtype=jnp.float32) * std

    keys = iter(jax.random.split(key, 16 + 24 * cfg.num_layers))
    H, F, r = cfg.hidden, cfg.ffn, cfg.lora_r
    p = {
        "embed_tokens": nrm(next(keys), (cfg.vocab, H)),
        "embed_positions": nrm(next(keys), (cfg.max_pos + cfg.pos_offset, H)),
        "ln_emb_g": jnp.ones((H,), jnp.float32),
        "ln_emb_b": jnp.zeros((H,), jnp.float32),
        "ln_final_g": jnp.ones((H,), jnp.float32),
        "ln_final_b": jnp.zeros((H,), jnp.float32),
        "layers": [],
    }
    for _ in range(cfg.num_layers):
        layer = {
            "ln1_g": jnp.ones((H,), jnp.float32), "ln1_b": jnp.zeros((H,), jnp.float32),
            "q_w": nrm(next(keys), (H, H)), "q_b": jnp.zeros((H,), jnp.float32),
            "k_w": nrm(next(keys), (H, H)), "k_b": jnp.zeros((H,), jnp.float32),
            "v_w": nrm(next(keys), (H, H)), "v_b": jnp.zeros((H,), jnp.float32),
            "o_w": nrm(next(keys), (H, H)), "o_b": jnp.zeros((H,), jnp.float32),
            # LoRA adapters on q_proj / v_proj (peft default target modules).
            # Note: peft inits lora_B to zeros; non-zero here so the path is exercised.
            "q_lA": nrm(next(keys), (r, H)), "q_lB": nrm(next(keys), (H, r)),
            "v_lA": nrm(next(keys), (r, H)), "v_lB": nrm(next(keys), (H, r)),
            "ln2_g": jnp.ones((H,), jnp.float32), "ln2_b": jnp.zeros((H,), jnp.float32),
            "fc1_w": nrm(next(keys), (F, H)), "fc1_b": jnp.zeros((F,), jnp.float32),
            "fc2_w": nrm(next(keys), (H, F)), "fc2_b": jnp.zeros((H,), jnp.float32),
        }
        p["layers"].append(layer)
    return p


def pack_layer_params(layers, cfg):
    """Stack per-layer weights on a leading L axis, fold the LoRA adapters into
    the base q/v weights (eval mode), and pre-cast matmul weights to bf16."""
    bf16 = jnp.bfloat16
    lora_scale = cfg.lora_alpha / cfg.lora_r

    def st(name):
        return jnp.stack([lyr[name] for lyr in layers], axis=0)

    def vec(name):                           # (L, X) -> (L, 1, X), fp32 (VPU adds)
        return st(name)[:, None, :]

    # h @ (W + s*(lB@lA)).T  ==  h @ W.T + s * (h @ lA.T) @ lB.T
    q_w = jnp.stack([lyr["q_w"] + lora_scale * (lyr["q_lB"] @ lyr["q_lA"])
                     for lyr in layers], axis=0)
    v_w = jnp.stack([lyr["v_w"] + lora_scale * (lyr["v_lB"] @ lyr["v_lA"])
                     for lyr in layers], axis=0)

    return dict(
        ln1_g=vec("ln1_g"), ln1_b=vec("ln1_b"),
        q_w=q_w.astype(bf16), q_b=vec("q_b"),
        k_w=st("k_w").astype(bf16), k_b=vec("k_b"),
        v_w=v_w.astype(bf16), v_b=vec("v_b"),
        o_w=st("o_w").astype(bf16), o_b=vec("o_b"),
        ln2_g=vec("ln2_g"), ln2_b=vec("ln2_b"),
        fc1_w=st("fc1_w").astype(bf16), fc1_b=vec("fc1_b"),
        fc2_w=st("fc2_w").astype(bf16), fc2_b=vec("fc2_b"),
    )


# ----------------------------- forward (batch x layer grid) ------------------

def encoder_forward(params, input_ids, attention_mask, cfg):
    B, S = input_ids.shape
    H, F = cfg.hidden, cfg.ffn
    NH = cfg.num_heads
    D = H // NH
    L = cfg.num_layers
    embed_scale = math.sqrt(H)   # mbart-large-cc25: scale_embedding=True

    # Embedding gather + positional lookup in plain JAX (dynamic-index gather;
    # tiny glue).  Everything downstream runs in the layer-streamed kernel.
    x = jnp.take(params["embed_tokens"], input_ids, axis=0) * embed_scale       # (B,S,H)
    pos = jnp.take(params["embed_positions"],
                   jnp.arange(S, dtype=jnp.int32) + cfg.pos_offset, axis=0)     # (S,H)
    x = (x + pos[None]).astype(jnp.float32)                                     # (B,S,H)

    # Additive key-padding bias, (B, 1, S) — no (T,T) mask materialization.
    kbias = ((1.0 - attention_mask.astype(jnp.float32)) * -1e9).reshape(B, 1, S)

    packed = pack_layer_params(params["layers"], cfg)

    def batch_spec(shape):       # (B, ...) -> per-batch block, squeezed leading dim
        nd = len(shape)
        return pl.BlockSpec((None,) + tuple(shape[1:]),
                            lambda b, l, _nd=nd: (b,) + (0,) * (_nd - 1))

    def layer_spec(shape):       # (L, ...) -> per-layer block (streamed over l)
        nd = len(shape)
        return pl.BlockSpec((None,) + tuple(shape[1:]),
                            lambda b, l, _nd=nd: (l,) + (0,) * (_nd - 1))

    def shared_spec(shape):      # same block for every grid step
        nd = len(shape)
        return pl.BlockSpec(tuple(shape), lambda b, l, _nd=nd: (0,) * _nd)

    in_args = [
        x, kbias,
        params["ln_emb_g"].reshape(1, H), params["ln_emb_b"].reshape(1, H),
        params["ln_final_g"].reshape(1, H), params["ln_final_b"].reshape(1, H),
        packed["ln1_g"], packed["ln1_b"],
        packed["q_w"], packed["q_b"], packed["k_w"], packed["k_b"],
        packed["v_w"], packed["v_b"], packed["o_w"], packed["o_b"],
        packed["ln2_g"], packed["ln2_b"],
        packed["fc1_w"], packed["fc1_b"], packed["fc2_w"], packed["fc2_b"],
    ]
    in_specs = (
        [batch_spec(x.shape), batch_spec(kbias.shape)]
        + [shared_spec((1, H))] * 4
        + [layer_spec(packed[name].shape) for name in (
            "ln1_g", "ln1_b", "q_w", "q_b", "k_w", "k_b", "v_w", "v_b",
            "o_w", "o_b", "ln2_g", "ln2_b", "fc1_w", "fc1_b", "fc2_w", "fc2_b")]
    )

    kernel = functools.partial(
        _encoder_kernel, num_layers=L, num_heads=NH, head_dim=D)

    out = pl.pallas_call(
        kernel,
        out_shape=jax.ShapeDtypeStruct((B, S, H), jnp.float32),
        grid_spec=pltpu.PrefetchScalarGridSpec(
            num_scalar_prefetch=0,
            grid=(B, L),                                   # batch (parallel) x layer (arbitrary)
            in_specs=in_specs,
            out_specs=pl.BlockSpec((None, S, H), lambda b, l: (b, 0, 0)),
            scratch_shapes=[
                pltpu.VMEM((S, H), jnp.float32),           # hidden-state carry across layers
                pltpu.VMEM((NH, S, D), jnp.float32),       # q heads
                pltpu.VMEM((NH, S, D), jnp.float32),       # k heads
                pltpu.VMEM((NH, S, D), jnp.float32),       # v heads
                pltpu.VMEM((S, H), jnp.float32),           # merged attention output
            ]),
        compiler_params=pltpu.CompilerParams(
            dimension_semantics=("parallel", "arbitrary"),
            vmem_limit_bytes=32 * 1024 * 1024),
    )(*in_args)
    return out                                              # last_hidden_state (B,S,H)


# ----------------------------- pure-JAX fp32 reference -----------------------

def _reference_forward(params, input_ids, attention_mask, cfg):
    B, S = input_ids.shape
    H, NH = cfg.hidden, cfg.num_heads
    D = H // NH
    lora_scale = cfg.lora_alpha / cfg.lora_r
    embed_scale = math.sqrt(H)

    def ln(x, g, b):
        mu = x.mean(-1, keepdims=True)
        var = ((x - mu) ** 2).mean(-1, keepdims=True)
        return (x - mu) / jnp.sqrt(var + 1e-5) * g + b

    x = jnp.take(params["embed_tokens"], input_ids, axis=0) * embed_scale
    pos = jnp.take(params["embed_positions"],
                   jnp.arange(S, dtype=jnp.int32) + cfg.pos_offset, axis=0)
    x = x + pos[None]
    x = ln(x, params["ln_emb_g"], params["ln_emb_b"])
    add_mask = (1.0 - attention_mask.astype(jnp.float32)) * -1e9          # (B, S)

    for p in params["layers"]:
        residual = x
        h = ln(x, p["ln1_g"], p["ln1_b"])
        q = h @ p["q_w"].T + p["q_b"] + lora_scale * ((h @ p["q_lA"].T) @ p["q_lB"].T)
        k = h @ p["k_w"].T + p["k_b"]
        v = h @ p["v_w"].T + p["v_b"] + lora_scale * ((h @ p["v_lA"].T) @ p["v_lB"].T)
        qh = q.reshape(B, S, NH, D).transpose(0, 2, 1, 3)
        kh = k.reshape(B, S, NH, D).transpose(0, 2, 1, 3)
        vh = v.reshape(B, S, NH, D).transpose(0, 2, 1, 3)
        s = jnp.einsum("bhqd,bhkd->bhqk", qh, kh) * (D ** -0.5)
        s = s + add_mask[:, None, None, :]
        a = jax.nn.softmax(s, axis=-1)
        o = jnp.einsum("bhqk,bhkd->bhqd", a, vh).transpose(0, 2, 1, 3).reshape(B, S, H)
        x = residual + o @ p["o_w"].T + p["o_b"]
        residual = x
        h = ln(x, p["ln2_g"], p["ln2_b"])
        h = jax.nn.gelu(h @ p["fc1_w"].T + p["fc1_b"], approximate=True)
        h = h @ p["fc2_w"].T + p["fc2_b"]
        x = residual + h

    return ln(x, params["ln_final_g"], params["ln_final_b"])


# --------------------------------- main --------------------------------------

if __name__ == "__main__":
    B, S = 2, 8
    key = jax.random.PRNGKey(0)
    k_param, k_ids = jax.random.split(key)

    params = init_params(k_param, CFG)
    input_ids = jax.random.randint(k_ids, (B, S), 0, CFG.vocab, dtype=jnp.int32)
    attention_mask = jnp.ones((B, S), dtype=jnp.int32)
    attention_mask = attention_mask.at[1, -2:].set(0)   # pad out last 2 tokens of row 1

    fwd = jax.jit(lambda p, ids, m: encoder_forward(p, ids, m, CFG))
    out = jax.block_until_ready(fwd(params, input_ids, attention_mask))

    assert out.shape == (B, S, CFG.hidden)
    assert bool(jnp.all(jnp.isfinite(out)))

    # sanity check against the fp32 pure-JAX reference (loose tol: bf16 matmuls
    # + approx softmax reciprocal inside the kernel)
    ref = _reference_forward(params, input_ids, attention_mask, CFG)
    max_err = float(jnp.max(jnp.abs(out - ref)))
    assert max_err < 1e-1, f"mismatch vs fp32 reference: {max_err}"

    print("KERNEL_OK")
</pallas_src>

<mosaic_0001>
module attributes {stable_mosaic.version = 11 : i64} {
  func.func @_encoder_kernel(%arg0: i32, %arg1: i32, %arg2: memref<1x8x32xf32, #tpu.memory_space<vmem>>, %arg3: memref<1x1x8xf32, #tpu.memory_space<vmem>>, %arg4: memref<1x32xf32, #tpu.memory_space<vmem>>, %arg5: memref<1x32xf32, #tpu.memory_space<vmem>>, %arg6: memref<1x32xf32, #tpu.memory_space<vmem>>, %arg7: memref<1x32xf32, #tpu.memory_space<vmem>>, %arg8: memref<1x1x32xf32, #tpu.memory_space<vmem>>, %arg9: memref<1x1x32xf32, #tpu.memory_space<vmem>>, %arg10: memref<1x32x32xbf16, #tpu.memory_space<vmem>>, %arg11: memref<1x1x32xf32, #tpu.memory_space<vmem>>, %arg12: memref<1x32x32xbf16, #tpu.memory_space<vmem>>, %arg13: memref<1x1x32xf32, #tpu.memory_space<vmem>>, %arg14: memref<1x32x32xbf16, #tpu.memory_space<vmem>>, %arg15: memref<1x1x32xf32, #tpu.memory_space<vmem>>, %arg16: memref<1x32x32xbf16, #tpu.memory_space<vmem>>, %arg17: memref<1x1x32xf32, #tpu.memory_space<vmem>>, %arg18: memref<1x1x32xf32, #tpu.memory_space<vmem>>, %arg19: memref<1x1x32xf32, #tpu.memory_space<vmem>>, %arg20: memref<1x64x32xbf16, #tpu.memory_space<vmem>>, %arg21: memref<1x1x64xf32, #tpu.memory_space<vmem>>, %arg22: memref<1x32x64xbf16, #tpu.memory_space<vmem>>, %arg23: memref<1x1x32xf32, #tpu.memory_space<vmem>>, %arg24: memref<1x8x32xf32, #tpu.memory_space<vmem>>, %arg25: memref<8x32xf32, #tpu.memory_space<vmem>>, %arg26: memref<4x8x8xf32, #tpu.memory_space<vmem>>, %arg27: memref<4x8x8xf32, #tpu.memory_space<vmem>>, %arg28: memref<4x8x8xf32, #tpu.memory_space<vmem>>, %arg29: memref<8x32xf32, #tpu.memory_space<vmem>>) attributes {dimension_semantics = [#tpu.dimension_semantics<parallel>, #tpu.dimension_semantics<arbitrary>], iteration_bounds = array<i64: 2, 2>, scalar_prefetch = 0 : i64, scratch_operands = 5 : i64, tpu.core_type = #tpu.core_type<tc>, window_params = [{transform_indices = @transform_0, window_bounds = array<i64: 1, 8, 32>}, {transform_indices = @transform_1, window_bounds = array<i64: 1, 1, 8>}, {pipeline_mode = #tpu.pipeline_mode<synchronous>, transform_indices = @transform_2, window_bounds = array<i64: 1, 32>}, {pipeline_mode = #tpu.pipeline_mode<synchronous>, transform_indices = @transform_3, window_bounds = array<i64: 1, 32>}, {pipeline_mode = #tpu.pipeline_mode<synchronous>, transform_indices = @transform_4, window_bounds = array<i64: 1, 32>}, {pipeline_mode = #tpu.pipeline_mode<synchronous>, transform_indices = @transform_5, window_bounds = array<i64: 1, 32>}, {transform_indices = @transform_6, window_bounds = array<i64: 1, 1, 32>}, {transform_indices = @transform_7, window_bounds = array<i64: 1, 1, 32>}, {transform_indices = @transform_8, window_bounds = array<i64: 1, 32, 32>}, {transform_indices = @transform_9, window_bounds = array<i64: 1, 1, 32>}, {transform_indices = @transform_10, window_bounds = array<i64: 1, 32, 32>}, {transform_indices = @transform_11, window_bounds = array<i64: 1, 1, 32>}, {transform_indices = @transform_12, window_bounds = array<i64: 1, 32, 32>}, {transform_indices = @transform_13, window_bounds = array<i64: 1, 1, 32>}, {transform_indices = @transform_14, window_bounds = array<i64: 1, 32, 32>}, {transform_indices = @transform_15, window_bounds = array<i64: 1, 1, 32>}, {transform_indices = @transform_16, window_bounds = array<i64: 1, 1, 32>}, {transform_indices = @transform_17, window_bounds = array<i64: 1, 1, 32>}, {transform_indices = @transform_18, window_bounds = array<i64: 1, 64, 32>}, {transform_indices = @transform_19, window_bounds = array<i64: 1, 1, 64>}, {transform_indices = @transform_20, window_bounds = array<i64: 1, 32, 64>}, {transform_indices = @transform_21, window_bounds = array<i64: 1, 1, 32>}, {transform_indices = @transform_22, window_bounds = array<i64: 1, 8, 32>}]} {
    %c0_i32 = arith.constant 0 : i32
    %0 = arith.cmpi eq, %arg1, %c0_i32 : i32
    %1 = arith.extui %0 : i1 to i32
    %c0_i32_0 = arith.constant 0 : i32
    %2 = arith.cmpi ne, %1, %c0_i32_0 : i32
    scf.if %2 {
      %c0_129 = arith.constant 0 : index
      %c0_130 = arith.constant 0 : index
      %c0_131 = arith.constant 0 : index
      %204 = vector.load %arg2[%c0_129, %c0_130, %c0_131] : memref<1x8x32xf32, #tpu.memory_space<vmem>>, vector<1x8x32xf32>
      %205 = vector.shape_cast %204 : vector<1x8x32xf32> to vector<8x32xf32>
      %cst_132 = arith.constant dense<0.000000e+00> : vector<8xf32>
      %206 = vector.multi_reduction <add>, %205, %cst_132 [1] : vector<8x32xf32> to vector<8xf32>
      %207 = vector.shape_cast %206 : vector<8xf32> to vector<8x1xf32>
      %cst_133 = arith.constant 3.200000e+01 : f32
      %208 = vector.broadcast %cst_133 : f32 to vector<8x1xf32>
      %209 = arith.divf %207, %208 : vector<8x1xf32>
      %210 = vector.broadcast %209 : vector<8x1xf32> to vector<8x32xf32>
      %211 = arith.subf %205, %210 : vector<8x32xf32>
      %212 = arith.mulf %211, %211 : vector<8x32xf32>
      %cst_134 = arith.constant dense<0.000000e+00> : vector<8xf32>
      %213 = vector.multi_reduction <add>, %212, %cst_134 [1] : vector<8x32xf32> to vector<8xf32>
      %214 = vector.shape_cast %213 : vector<8xf32> to vector<8x1xf32>
      %cst_135 = arith.constant 3.200000e+01 : f32
      %215 = vector.broadcast %cst_135 : f32 to vector<8x1xf32>
      %216 = arith.divf %214, %215 : vector<8x1xf32>
      %cst_136 = arith.constant 9.99999974E-6 : f32
      %217 = vector.broadcast %cst_136 : f32 to vector<8x1xf32>
      %218 = arith.addf %216, %217 : vector<8x1xf32>
      %219 = math.rsqrt %218 : vector<8x1xf32>
      %220 = vector.broadcast %219 : vector<8x1xf32> to vector<8x32xf32>
      %221 = arith.mulf %211, %220 : vector<8x32xf32>
      %c0_137 = arith.constant 0 : index
      %c0_138 = arith.constant 0 : index
      %222 = vector.load %arg4[%c0_137, %c0_138] : memref<1x32xf32, #tpu.memory_space<vmem>>, vector<1x32xf32>
      %223 = vector.broadcast %222 : vector<1x32xf32> to vector<8x32xf32>
      %224 = arith.mulf %221, %223 : vector<8x32xf32>
      %c0_139 = arith.constant 0 : index
      %c0_140 = arith.constant 0 : index
      %225 = vector.load %arg5[%c0_139, %c0_140] : memref<1x32xf32, #tpu.memory_space<vmem>>, vector<1x32xf32>
      %226 = vector.broadcast %225 : vector<1x32xf32> to vector<8x32xf32>
      %227 = arith.addf %224, %226 : vector<8x32xf32>
      %c0_141 = arith.constant 0 : index
      %c0_142 = arith.constant 0 : index
      %228 = vector.load %arg25[%c0_141, %c0_142] : memref<8x32xf32, #tpu.memory_space<vmem>>, vector<8x32xf32>
      tpu.vector_store %arg25[%c0_141, %c0_142], %227 {strides = array<i32>} : memref<8x32xf32, #tpu.memory_space<vmem>>, vector<8x32xf32>,
    } else {
    }
    %c0 = arith.constant 0 : index
    %c0_1 = arith.constant 0 : index
    %3 = vector.load %arg25[%c0, %c0_1] : memref<8x32xf32, #tpu.memory_space<vmem>>, vector<8x32xf32>
    %cst = arith.constant dense<0.000000e+00> : vector<8xf32>
    %4 = vector.multi_reduction <add>, %3, %cst [1] : vector<8x32xf32> to vector<8xf32>
    %5 = vector.shape_cast %4 : vector<8xf32> to vector<8x1xf32>
    %cst_2 = arith.constant 3.200000e+01 : f32
    %6 = vector.broadcast %cst_2 : f32 to vector<8x1xf32>
    %7 = arith.divf %5, %6 : vector<8x1xf32>
    %8 = vector.broadcast %7 : vector<8x1xf32> to vector<8x32xf32>
    %9 = arith.subf %3, %8 : vector<8x32xf32>
    %10 = arith.mulf %9, %9 : vector<8x32xf32>
    %cst_3 = arith.constant dense<0.000000e+00> : vector<8xf32>
    %11 = vector.multi_reduction <add>, %10, %cst_3 [1] : vector<8x32xf32> to vector<8xf32>
    %12 = vector.shape_cast %11 : vector<8xf32> to vector<8x1xf32>
    %cst_4 = arith.constant 3.200000e+01 : f32
    %13 = vector.broadcast %cst_4 : f32 to vector<8x1xf32>
    %14 = arith.divf %12, %13 : vector<8x1xf32>
    %cst_5 = arith.constant 9.99999974E-6 : f32
    %15 = vector.broadcast %cst_5 : f32 to vector<8x1xf32>
    %16 = arith.addf %14, %15 : vector<8x1xf32>
    %17 = math.rsqrt %16 : vector<8x1xf32>
    %18 = vector.broadcast %17 : vector<8x1xf32> to vector<8x32xf32>
    %19 = arith.mulf %9, %18 : vector<8x32xf32>
    %c0_6 = arith.constant 0 : index
    %c0_7 = arith.constant 0 : index
    %c0_8 = arith.constant 0 : index
    %20 = vector.load %arg8[%c0_6, %c0_7, %c0_8] : memref<1x1x32xf32, #tpu.memory_space<vmem>>, vector<1x1x32xf32>
    %21 = vector.shape_cast %20 : vector<1x1x32xf32> to vector<1x32xf32>
    %22 = vector.broadcast %21 : vector<1x32xf32> to vector<8x32xf32>
    %23 = arith.mulf %19, %22 : vector<8x32xf32>
    %c0_9 = arith.constant 0 : index
    %c0_10 = arith.constant 0 : index
    %c0_11 = arith.constant 0 : index
    %24 = vector.load %arg9[%c0_9, %c0_10, %c0_11] : memref<1x1x32xf32, #tpu.memory_space<vmem>>, vector<1x1x32xf32>
    %25 = vector.shape_cast %24 : vector<1x1x32xf32> to vector<1x32xf32>
    %26 = vector.broadcast %25 : vector<1x32xf32> to vector<8x32xf32>
    %27 = arith.addf %23, %26 : vector<8x32xf32>
    %28 = arith.truncf %27 : vector<8x32xf32> to vector<8x32xbf16>
    %c0_12 = arith.constant 0 : index
    %c0_13 = arith.constant 0 : index
    %c0_14 = arith.constant 0 : index
    %29 = vector.load %arg10[%c0_12, %c0_13, %c0_14] : memref<1x32x32xbf16, #tpu.memory_space<vmem>>, vector<1x32x32xbf16>
    %30 = vector.shape_cast %29 : vector<1x32x32xbf16> to vector<32x32xbf16>
    %cst_15 = arith.constant dense<0.000000e+00> : vector<8x32xf32>
    %31 = tpu.matmul %28, %30, %cst_15 {dimension_numbers = #tpu.dot_dimension_numbers<[1], [1], [0], [0], [0, 0, 1, 0], [], []>} : vector<8x32xbf16>, vector<32x32xbf16>, vector<8x32xf32> -> vector<8x32xf32>
    %c0_16 = arith.constant 0 : index
    %c0_17 = arith.constant 0 : index
    %c0_18 = arith.constant 0 : index
    %32 = vector.load %arg11[%c0_16, %c0_17, %c0_18] : memref<1x1x32xf32, #tpu.memory_space<vmem>>, vector<1x1x32xf32>
    %33 = vector.shape_cast %32 : vector<1x1x32xf32> to vector<1x32xf32>
    %34 = vector.broadcast %33 : vector<1x32xf32> to vector<8x32xf32>
    %35 = arith.addf %31, %34 : vector<8x32xf32>
    %c0_19 = arith.constant 0 : index
    %c0_20 = arith.constant 0 : index
    %c0_21 = arith.constant 0 : index
    %36 = vector.load %arg12[%c0_19, %c0_20, %c0_21] : memref<1x32x32xbf16, #tpu.memory_space<vmem>>, vector<1x32x32xbf16>
    %37 = vector.shape_cast %36 : vector<1x32x32xbf16> to vector<32x32xbf16>
    %cst_22 = arith.constant dense<0.000000e+00> : vector<8x32xf32>
    %38 = tpu.matmul %28, %37, %cst_22 {dimension_numbers = #tpu.dot_dimension_numbers<[1], [1], [0], [0], [0, 0, 1, 0], [], []>} : vector<8x32xbf16>, vector<32x32xbf16>, vector<8x32xf32> -> vector<8x32xf32>
    %c0_23 = arith.constant 0 : index
    %c0_24 = arith.constant 0 : index
    %c0_25 = arith.constant 0 : index
    %39 = vector.load %arg13[%c0_23, %c0_24, %c0_25] : memref<1x1x32xf32, #tpu.memory_space<vmem>>, vector<1x1x32xf32>
    %40 = vector.shape_cast %39 : vector<1x1x32xf32> to vector<1x32xf32>
    %41 = vector.broadcast %40 : vector<1x32xf32> to vector<8x32xf32>
    %42 = arith.addf %38, %41 : vector<8x32xf32>
    %c0_26 = arith.constant 0 : index
    %c0_27 = arith.constant 0 : index
    %c0_28 = arith.constant 0 : index
    %43 = vector.load %arg14[%c0_26, %c0_27, %c0_28] : memref<1x32x32xbf16, #tpu.memory_space<vmem>>, vector<1x32x32xbf16>
    %44 = vector.shape_cast %43 : vector<1x32x32xbf16> to vector<32x32xbf16>
    %cst_29 = arith.constant dense<0.000000e+00> : vector<8x32xf32>
    %45 = tpu.matmul %28, %44, %cst_29 {dimension_numbers = #tpu.dot_dimension_numbers<[1], [1], [0], [0], [0, 0, 1, 0], [], []>} : vector<8x32xbf16>, vector<32x32xbf16>, vector<8x32xf32> -> vector<8x32xf32>
    %c0_30 = arith.constant 0 : index
    %c0_31 = arith.constant 0 : index
    %c0_32 = arith.constant 0 : index
    %46 = vector.load %arg15[%c0_30, %c0_31, %c0_32] : memref<1x1x32xf32, #tpu.memory_space<vmem>>, vector<1x1x32xf32>
    %47 = vector.shape_cast %46 : vector<1x1x32xf32> to vector<1x32xf32>
    %48 = vector.broadcast %47 : vector<1x32xf32> to vector<8x32xf32>
    %49 = arith.addf %45, %48 : vector<8x32xf32>
    %50 = vector.extract_strided_slice %35 {offsets = [0, 0], sizes = [8, 8], strides = [1, 1]} : vector<8x32xf32> to vector<8x8xf32>
    %c0_33 = arith.constant 0 : index
    %c0_34 = arith.constant 0 : index
    %c0_35 = arith.constant 0 : index
    %51 = vector.load %arg26[%c0_33, %c0_34, %c0_35] : memref<4x8x8xf32, #tpu.memory_space<vmem>>, vector<1x8x8xf32>
    %52 = vector.shape_cast %51 : vector<1x8x8xf32> to vector<8x8xf32>
    %53 = vector.shape_cast %50 : vector<8x8xf32> to vector<1x8x8xf32>
    tpu.vector_store %arg26[%c0_33, %c0_34, %c0_35], %53 {strides = array<i32>} : memref<4x8x8xf32, #tpu.memory_space<vmem>>, vector<1x8x8xf32>,
    %54 = vector.extract_strided_slice %42 {offsets = [0, 0], sizes = [8, 8], strides = [1, 1]} : vector<8x32xf32> to vector<8x8xf32>
    %c0_36 = arith.constant 0 : index
    %c0_37 = arith.constant 0 : index
    %c0_38 = arith.constant 0 : index
    %55 = vector.load %arg27[%c0_36, %c0_37, %c0_38] : memref<4x8x8xf32, #tpu.memory_space<vmem>>, vector<1x8x8xf32>
    %56 = vector.shape_cast %55 : vector<1x8x8xf32> to vector<8x8xf32>
    %57 = vector.shape_cast %54 : vector<8x8xf32> to vector<1x8x8xf32>
    tpu.vector_store %arg27[%c0_36, %c0_37, %c0_38], %57 {strides = array<i32>} : memref<4x8x8xf32, #tpu.memory_space<vmem>>, vector<1x8x8xf32>,
    %58 = vector.extract_strided_slice %49 {offsets = [0, 0], sizes = [8, 8], strides = [1, 1]} : vector<8x32xf32> to vector<8x8xf32>
    %c0_39 = arith.constant 0 : index
    %c0_40 = arith.constant 0 : index
    %c0_41 = arith.constant 0 : index
    %59 = vector.load %arg28[%c0_39, %c0_40, %c0_41] : memref<4x8x8xf32, #tpu.memory_space<vmem>>, vector<1x8x8xf32>
    %60 = vector.shape_cast %59 : vector<1x8x8xf32> to vector<8x8xf32>
    %61 = vector.shape_cast %58 : vector<8x8xf32> to vector<1x8x8xf32>
    tpu.vector_store %arg28[%c0_39, %c0_40, %c0_41], %61 {strides = array<i32>} : memref<4x8x8xf32, #tpu.memory_space<vmem>>, vector<1x8x8xf32>,
    %62 = vector.extract_strided_slice %35 {offsets = [0, 8], sizes = [8, 8], strides = [1, 1]} : vector<8x32xf32> to vector<8x8xf32>
    %c1 = arith.constant 1 : index
    %c0_42 = arith.constant 0 : index
    %c0_43 = arith.constant 0 : index
    %63 = vector.load %arg26[%c1, %c0_42, %c0_43] : memref<4x8x8xf32, #tpu.memory_space<vmem>>, vector<1x8x8xf32>
    %64 = vector.shape_cast %63 : vector<1x8x8xf32> to vector<8x8xf32>
    %65 = vector.shape_cast %62 : vector<8x8xf32> to vector<1x8x8xf32>
    tpu.vector_store %arg26[%c1, %c0_42, %c0_43], %65 {strides = array<i32>} : memref<4x8x8xf32, #tpu.memory_space<vmem>>, vector<1x8x8xf32>,
    %66 = vector.extract_strided_slice %42 {offsets = [0, 8], sizes = [8, 8], strides = [1, 1]} : vector<8x32xf32> to vector<8x8xf32>
    %c1_44 = arith.constant 1 : index
    %c0_45 = arith.constant 0 : index
    %c0_46 = arith.constant 0 : index
    %67 = vector.load %arg27[%c1_44, %c0_45, %c0_46] : memref<4x8x8xf32, #tpu.memory_space<vmem>>, vector<1x8x8xf32>
    %68 = vector.shape_cast %67 : vector<1x8x8xf32> to vector<8x8xf32>
    %69 = vector.shape_cast %66 : vector<8x8xf32> to vector<1x8x8xf32>
    tpu.vector_store %arg27[%c1_44, %c0_45, %c0_46], %69 {strides = array<i32>} : memref<4x8x8xf32, #tpu.memory_space<vmem>>, vector<1x8x8xf32>,
    %70 = vector.extract_strided_slice %49 {offsets = [0, 8], sizes = [8, 8], strides = [1, 1]} : vector<8x32xf32> to vector<8x8xf32>
    %c1_47 = arith.constant 1 : index
    %c0_48 = arith.constant 0 : index
    %c0_49 = arith.constant 0 : index
    %71 = vector.load %arg28[%c1_47, %c0_48, %c0_49] : memref<4x8x8xf32, #tpu.memory_space<vmem>>, vector<1x8x8xf32>
    %72 = vector.shape_cast %71 : vector<1x8x8xf32> to vector<8x8xf32>
    %73 = vector.shape_cast %70 : vector<8x8xf32> to vector<1x8x8xf32>
    tpu.vector_store %arg28[%c1_47, %c0_48, %c0_49], %73 {strides = array<i32>} : memref<4x8x8xf32, #tpu.memory_space<vmem>>, vector<1x8x8xf32>,
    %74 = vector.extract_strided_slice %35 {offsets = [0, 16], sizes = [8, 8], strides = [1, 1]} : vector<8x32xf32> to vector<8x8xf32>
    %c2 = arith.constant 2 : index
    %c0_50 = arith.constant 0 : index
    %c0_51 = arith.constant 0 : index
    %75 = vector.load %arg26[%c2, %c0_50, %c0_51] : memref<4x8x8xf32, #tpu.memory_space<vmem>>, vector<1x8x8xf32>
    %76 = vector.shape_cast %75 : vector<1x8x8xf32> to vector<8x8xf32>
    %77 = vector.shape_cast %74 : vector<8x8xf32> to vector<1x8x8xf32>
    tpu.vector_store %arg26[%c2, %c0_50, %c0_51], %77 {strides = array<i32>} : memref<4x8x8xf32, #tpu.memory_space<vmem>>, vector<1x8x8xf32>,
    %78 = vector.extract_strided_slice %42 {offsets = [0, 16], sizes = [8, 8], strides = [1, 1]} : vector<8x32xf32> to vector<8x8xf32>
    %c2_52 = arith.constant 2 : index
    %c0_53 = arith.constant 0 : index
    %c0_54 = arith.constant 0 : index
    %79 = vector.load %arg27[%c2_52, %c0_53, %c0_54] : memref<4x8x8xf32, #tpu.memory_space<vmem>>, vector<1x8x8xf32>
    %80 = vector.shape_cast %79 : vector<1x8x8xf32> to vector<8x8xf32>
    %81 = vector.shape_cast %78 : vector<8x8xf32> to vector<1x8x8xf32>
    tpu.vector_store %arg27[%c2_52, %c0_53, %c0_54], %81 {strides = array<i32>} : memref<4x8x8xf32, #tpu.memory_space<vmem>>, vector<1x8x8xf32>,
    %82 = vector.extract_strided_slice %49 {offsets = [0, 16], sizes = [8, 8], strides = [1, 1]} : vector<8x32xf32> to vector<8x8xf32>
    %c2_55 = arith.constant 2 : index
    %c0_56 = arith.constant 0 : index
    %c0_57 = arith.constant 0 : index
    %83 = vector.load %arg28[%c2_55, %c0_56, %c0_57] : memref<4x8x8xf32, #tpu.memory_space<vmem>>, vector<1x8x8xf32>
    %84 = vector.shape_cast %83 : vector<1x8x8xf32> to vector<8x8xf32>
    %85 = vector.shape_cast %82 : vector<8x8xf32> to vector<1x8x8xf32>
    tpu.vector_store %arg28[%c2_55, %c0_56, %c0_57], %85 {strides = array<i32>} : memref<4x8x8xf32, #tpu.memory_space<vmem>>, vector<1x8x8xf32>,
    %86 = vector.extract_strided_slice %35 {offsets = [0, 24], sizes = [8, 8], strides = [1, 1]} : vector<8x32xf32> to vector<8x8xf32>
    %c3 = arith.constant 3 : index
    %c0_58 = arith.constant 0 : index
    %c0_59 = arith.constant 0 : index
    %87 = vector.load %arg26[%c3, %c0_58, %c0_59] : memref<4x8x8xf32, #tpu.memory_space<vmem>>, vector<1x8x8xf32>
    %88 = vector.shape_cast %87 : vector<1x8x8xf32> to vector<8x8xf32>
    %89 = vector.shape_cast %86 : vector<8x8xf32> to vector<1x8x8xf32>
    tpu.vector_store %arg26[%c3, %c0_58, %c0_59], %89 {strides = array<i32>} : memref<4x8x8xf32, #tpu.memory_space<vmem>>, vector<1x8x8xf32>,
    %90 = vector.extract_strided_slice %42 {offsets = [0, 24], sizes = [8, 8], strides = [1, 1]} : vector<8x32xf32> to vector<8x8xf32>
    %c3_60 = arith.constant 3 : index
    %c0_61 = arith.constant 0 : index
    %c0_62 = arith.constant 0 : index
    %91 = vector.load %arg27[%c3_60, %c0_61, %c0_62] : memref<4x8x8xf32, #tpu.memory_space<vmem>>, vector<1x8x8xf32>
    %92 = vector.shape_cast %91 : vector<1x8x8xf32> to vector<8x8xf32>
    %93 = vector.shape_cast %90 : vector<8x8xf32> to vector<1x8x8xf32>
    tpu.vector_store %arg27[%c3_60, %c0_61, %c0_62], %93 {strides = array<i32>} : memref<4x8x8xf32, #tpu.memory_space<vmem>>, vector<1x8x8xf32>,
    %94 = vector.extract_strided_slice %49 {offsets = [0, 24], sizes = [8, 8], strides = [1, 1]} : vector<8x32xf32> to vector<8x8xf32>
    %c3_63 = arith.constant 3 : index
    %c0_64 = arith.constant 0 : index
    %c0_65 = arith.constant 0 : index
    %95 = vector.load %arg28[%c3_63, %c0_64, %c0_65] : memref<4x8x8xf32, #tpu.memory_space<vmem>>, vector<1x8x8xf32>
    %96 = vector.shape_cast %95 : vector<1x8x8xf32> to vector<8x8xf32>
    %97 = vector.shape_cast %94 : vector<8x8xf32> to vector<1x8x8xf32>
    tpu.vector_store %arg28[%c3_63, %c0_64, %c0_65], %97 {strides = array<i32>} : memref<4x8x8xf32, #tpu.memory_space<vmem>>, vector<1x8x8xf32>,
    %c0_66 = arith.constant 0 : index
    %c0_67 = arith.constant 0 : index
    %c0_68 = arith.constant 0 : index
    %98 = vector.load %arg26[%c0_66, %c0_67, %c0_68] : memref<4x8x8xf32, #tpu.memory_space<vmem>>, vector<4x8x8xf32>
    %99 = arith.truncf %98 : vector<4x8x8xf32> to vector<4x8x8xbf16>
    %c0_69 = arith.constant 0 : index
    %c0_70 = arith.constant 0 : index
    %c0_71 = arith.constant 0 : index
    %100 = vector.load %arg27[%c0_69, %c0_70, %c0_71] : memref<4x8x8xf32, #tpu.memory_space<vmem>>, vector<4x8x8xf32>
    %101 = arith.truncf %100 : vector<4x8x8xf32> to vector<4x8x8xbf16>
    %c0_72 = arith.constant 0 : index
    %c0_73 = arith.constant 0 : index
    %c0_74 = arith.constant 0 : index
    %102 = vector.load %arg28[%c0_72, %c0_73, %c0_74] : memref<4x8x8xf32, #tpu.memory_space<vmem>>, vector<4x8x8xf32>
    %103 = arith.truncf %102 : vector<4x8x8xf32> to vector<4x8x8xbf16>
    "tpu.trace_start"() <{level = 10 : i32, message = "hqd,hkd->hqk"}> : () -> ()
    %cst_75 = arith.constant dense<0.000000e+00> : vector<4x8x8xf32>
    %104 = tpu.matmul %99, %101, %cst_75 {dimension_numbers = #tpu.dot_dimension_numbers<[2], [2], [1], [1], [0, 0, 0, 1, 1, 1], [0], [0]>} : vector<4x8x8xbf16>, vector<4x8x8xbf16>, vector<4x8x8xf32> -> vector<4x8x8xf32>
    "tpu.trace_stop"() : () -> ()
    %cst_76 = arith.constant 0.353553385 : f32
    %105 = vector.broadcast %cst_76 : f32 to vector<4x8x8xf32>
    %106 = arith.mulf %104, %105 : vector<4x8x8xf32>
    %c0_77 = arith.constant 0 : index
    %c0_78 = arith.constant 0 : index
    %c0_79 = arith.constant 0 : index
    %107 = vector.load %arg3[%c0_77, %c0_78, %c0_79] : memref<1x1x8xf32, #tpu.memory_space<vmem>>, vector<1x1x8xf32>
    %108 = vector.shape_cast %107 : vector<1x1x8xf32> to vector<1x8xf32>
    %109 = vector.shape_cast %108 : vector<1x8xf32> to vector<1x1x8xf32>
    %110 = vector.broadcast %109 : vector<1x1x8xf32> to vector<4x8x8xf32>
    %111 = arith.addf %106, %110 : vector<4x8x8xf32>
    %cst_80 = arith.constant dense<0xFF800000> : vector<4x8xf32>
    %112 = vector.multi_reduction <maximumf>, %111, %cst_80 [2] : vector<4x8x8xf32> to vector<4x8xf32>
    %113 = vector.shape_cast %112 : vector<4x8xf32> to vector<4x8x1xf32>
    %114 = vector.broadcast %113 : vector<4x8x1xf32> to vector<4x8x8xf32>
    %115 = arith.subf %111, %114 : vector<4x8x8xf32>
    %116 = math.exp %115 : vector<4x8x8xf32>
    %cst_81 = arith.constant dense<0.000000e+00> : vector<4x8xf32>
    %117 = vector.multi_reduction <add>, %116, %cst_81 [2] : vector<4x8x8xf32> to vector<4x8xf32>
    %118 = vector.shape_cast %117 : vector<4x8xf32> to vector<4x8x1xf32>
    %119 = tpu.reciprocal %118 {approx = true} : vector<4x8x1xf32> -> vector<4x8x1xf32>
    %120 = vector.broadcast %119 : vector<4x8x1xf32> to vector<4x8x8xf32>
    %121 = arith.mulf %116, %120 : vector<4x8x8xf32>
    %122 = arith.truncf %121 : vector<4x8x8xf32> to vector<4x8x8xbf16>
    "tpu.trace_start"() <{level = 10 : i32, message = "hqk,hkd->hqd"}> : () -> ()
    %cst_82 = arith.constant dense<0.000000e+00> : vector<4x8x8xf32>
    %123 = tpu.matmul %122, %103, %cst_82 {dimension_numbers = #tpu.dot_dimension_numbers<[2], [1], [1], [2], [0, 0, 0, 1, 1, 2], [0], [0]>} : vector<4x8x8xbf16>, vector<4x8x8xbf16>, vector<4x8x8xf32> -> vector<4x8x8xf32>
    "tpu.trace_stop"() : () -> ()
    %124 = vector.extract_strided_slice %123 {offsets = [0, 0, 0], sizes = [1, 8, 8], strides = [1, 1, 1]} : vector<4x8x8xf32> to vector<1x8x8xf32>
    %125 = vector.shape_cast %124 : vector<1x8x8xf32> to vector<8x8xf32>
    %c0_83 = arith.constant 0 : index
    %c0_84 = arith.constant 0 : index
    %126 = vector.load %arg29[%c0_83, %c0_84] : memref<8x32xf32, #tpu.memory_space<vmem>>, vector<8x8xf32>
    tpu.vector_store %arg29[%c0_83, %c0_84], %125 {strides = array<i32>} : memref<8x32xf32, #tpu.memory_space<vmem>>, vector<8x8xf32>,
    %127 = vector.extract_strided_slice %123 {offsets = [1, 0, 0], sizes = [1, 8, 8], strides = [1, 1, 1]} : vector<4x8x8xf32> to vector<1x8x8xf32>
    %128 = vector.shape_cast %127 : vector<1x8x8xf32> to vector<8x8xf32>
    %c0_85 = arith.constant 0 : index
    %c8 = arith.constant 8 : index
    %129 = vector.load %arg29[%c0_85, %c8] : memref<8x32xf32, #tpu.memory_space<vmem>>, vector<8x8xf32>
    tpu.vector_store %arg29[%c0_85, %c8], %128 {strides = array<i32>} : memref<8x32xf32, #tpu.memory_space<vmem>>, vector<8x8xf32>,
    %130 = vector.extract_strided_slice %123 {offsets = [2, 0, 0], sizes = [1, 8, 8], strides = [1, 1, 1]} : vector<4x8x8xf32> to vector<1x8x8xf32>
    %131 = vector.shape_cast %130 : vector<1x8x8xf32> to vector<8x8xf32>
    %c0_86 = arith.constant 0 : index
    %c16 = arith.constant 16 : index
    %132 = vector.load %arg29[%c0_86, %c16] : memref<8x32xf32, #tpu.memory_space<vmem>>, vector<8x8xf32>
    tpu.vector_store %arg29[%c0_86, %c16], %131 {strides = array<i32>} : memref<8x32xf32, #tpu.memory_space<vmem>>, vector<8x8xf32>,
    %133 = vector.extract_strided_slice %123 {offsets = [3, 0, 0], sizes = [1, 8, 8], strides = [1, 1, 1]} : vector<4x8x8xf32> to vector<1x8x8xf32>
    %134 = vector.shape_cast %133 : vector<1x8x8xf32> to vector<8x8xf32>
    %c0_87 = arith.constant 0 : index
    %c24 = arith.constant 24 : index
    %135 = vector.load %arg29[%c0_87, %c24] : memref<8x32xf32, #tpu.memory_space<vmem>>, vector<8x8xf32>
    tpu.vector_store %arg29[%c0_87, %c24], %134 {strides = array<i32>} : memref<8x32xf32, #tpu.memory_space<vmem>>, vector<8x8xf32>,
    %c0_88 = arith.constant 0 : index
    %c0_89 = arith.constant 0 : index
    %136 = vector.load %arg29[%c0_88, %c0_89] : memref<8x32xf32, #tpu.memory_space<vmem>>, vector<8x32xf32>
    %137 = arith.truncf %136 : vector<8x32xf32> to vector<8x32xbf16>
    %c0_90 = arith.constant 0 : index
    %c0_91 = arith.constant 0 : index
    %c0_92 = arith.constant 0 : index
    %138 = vector.load %arg16[%c0_90, %c0_91, %c0_92] : memref<1x32x32xbf16, #tpu.memory_space<vmem>>, vector<1x32x32xbf16>
    %139 = vector.shape_cast %138 : vector<1x32x32xbf16> to vector<32x32xbf16>
    %cst_93 = arith.constant dense<0.000000e+00> : vector<8x32xf32>
    %140 = tpu.matmul %137, %139, %cst_93 {dimension_numbers = #tpu.dot_dimension_numbers<[1], [1], [0], [0], [0, 0, 1, 0], [], []>} : vector<8x32xbf16>, vector<32x32xbf16>, vector<8x32xf32> -> vector<8x32xf32>
    %c0_94 = arith.constant 0 : index
    %c0_95 = arith.constant 0 : index
    %c0_96 = arith.constant 0 : index
    %141 = vector.load %arg17[%c0_94, %c0_95, %c0_96] : memref<1x1x32xf32, #tpu.memory_space<vmem>>, vector<1x1x32xf32>
    %142 = vector.shape_cast %141 : vector<1x1x32xf32> to vector<1x32xf32>
    %143 = vector.broadcast %142 : vector<1x32xf32> to vector<8x32xf32>
    %144 = arith.addf %140, %143 : vector<8x32xf32>
    %145 = arith.addf %3, %144 : vector<8x32xf32>
    %cst_97 = arith.constant dense<0.000000e+00> : vector<8xf32>
    %146 = vector.multi_reduction <add>, %145, %cst_97 [1] : vector<8x32xf32> to vector<8xf32>
    %147 = vector.shape_cast %146 : vector<8xf32> to vector<8x1xf32>
    %cst_98 = arith.constant 3.200000e+01 : f32
    %148 = vector.broadcast %cst_98 : f32 to vector<8x1xf32>
    %149 = arith.divf %147, %148 : vector<8x1xf32>
    %150 = vector.broadcast %149 : vector<8x1xf32> to vector<8x32xf32>
    %151 = arith.subf %145, %150 : vector<8x32xf32>
    %152 = arith.mulf %151, %151 : vector<8x32xf32>
    %cst_99 = arith.constant dense<0.000000e+00> : vector<8xf32>
    %153 = vector.multi_reduction <add>, %152, %cst_99 [1] : vector<8x32xf32> to vector<8xf32>
    %154 = vector.shape_cast %153 : vector<8xf32> to vector<8x1xf32>
    %cst_100 = arith.constant 3.200000e+01 : f32
    %155 = vector.broadcast %cst_100 : f32 to vector<8x1xf32>
    %156 = arith.divf %154, %155 : vector<8x1xf32>
    %cst_101 = arith.constant 9.99999974E-6 : f32
    %157 = vector.broadcast %cst_101 : f32 to vector<8x1xf32>
    %158 = arith.addf %156, %157 : vector<8x1xf32>
    %159 = math.rsqrt %158 : vector<8x1xf32>
    %160 = vector.broadcast %159 : vector<8x1xf32> to vector<8x32xf32>
    %161 = arith.mulf %151, %160 : vector<8x32xf32>
    %c0_102 = arith.constant 0 : index
    %c0_103 = arith.constant 0 : index
    %c0_104 = arith.constant 0 : index
    %162 = vector.load %arg18[%c0_102, %c0_103, %c0_104] : memref<1x1x32xf32, #tpu.memory_space<vmem>>, vector<1x1x32xf32>
    %163 = vector.shape_cast %162 : vector<1x1x32xf32> to vector<1x32xf32>
    %164 = vector.broadcast %163 : vector<1x32xf32> to vector<8x32xf32>
    %165 = arith.mulf %161, %164 : vector<8x32xf32>
    %c0_105 = arith.constant 0 : index
    %c0_106 = arith.constant 0 : index
    %c0_107 = arith.constant 0 : index
    %166 = vector.load %arg19[%c0_105, %c0_106, %c0_107] : memref<1x1x32xf32, #tpu.memory_space<vmem>>, vector<1x1x32xf32>
    %167 = vector.shape_cast %166 : vector<1x1x32xf32> to vector<1x32xf32>
    %168 = vector.broadcast %167 : vector<1x32xf32> to vector<8x32xf32>
    %169 = arith.addf %165, %168 : vector<8x32xf32>
    %170 = arith.truncf %169 : vector<8x32xf32> to vector<8x32xbf16>
    %c0_108 = arith.constant 0 : index
    %c0_109 = arith.constant 0 : index
    %c0_110 = arith.constant 0 : index
    %171 = vector.load %arg20[%c0_108, %c0_109, %c0_110] : memref<1x64x32xbf16, #tpu.memory_space<vmem>>, vector<1x64x32xbf16>
    %172 = vector.shape_cast %171 : vector<1x64x32xbf16> to vector<64x32xbf16>
    %cst_111 = arith.constant dense<0.000000e+00> : vector<8x64xf32>
    %173 = tpu.matmul %170, %172, %cst_111 {dimension_numbers = #tpu.dot_dimension_numbers<[1], [1], [0], [0], [0, 0, 1, 0], [], []>} : vector<8x32xbf16>, vector<64x32xbf16>, vector<8x64xf32> -> vector<8x64xf32>
    %c0_112 = arith.constant 0 : index
    %c0_113 = arith.constant 0 : index
    %c0_114 = arith.constant 0 : index
    %174 = vector.load %arg21[%c0_112, %c0_113, %c0_114] : memref<1x1x64xf32, #tpu.memory_space<vmem>>, vector<1x1x64xf32>
    %175 = vector.shape_cast %174 : vector<1x1x64xf32> to vector<1x64xf32>
    %176 = vector.broadcast %175 : vector<1x64xf32> to vector<8x64xf32>
    %177 = arith.addf %173, %176 : vector<8x64xf32>
    %178 = arith.mulf %177, %177 : vector<8x64xf32>
    %179 = arith.mulf %177, %178 : vector<8x64xf32>
    %cst_115 = arith.constant 4.471500e-02 : f32
    %180 = vector.broadcast %cst_115 : f32 to vector<8x64xf32>
    %181 = arith.mulf %180, %179 : vector<8x64xf32>
    %182 = arith.addf %177, %181 : vector<8x64xf32>
    %cst_116 = arith.constant 0.797884583 : f32
    %183 = vector.broadcast %cst_116 : f32 to vector<8x64xf32>
    %184 = arith.mulf %183, %182 : vector<8x64xf32>
    %185 = math.tanh %184 : vector<8x64xf32>
    %cst_117 = arith.constant 1.000000e+00 : f32
    %186 = vector.broadcast %cst_117 : f32 to vector<8x64xf32>
    %187 = arith.addf %186, %185 : vector<8x64xf32>
    %cst_118 = arith.constant 5.000000e-01 : f32
    %188 = vector.broadcast %cst_118 : f32 to vector<8x64xf32>
    %189 = arith.mulf %188, %187 : vector<8x64xf32>
    %190 = arith.mulf %177, %189 : vector<8x64xf32>
    %191 = arith.truncf %190 : vector<8x64xf32> to vector<8x64xbf16>
    %c0_119 = arith.constant 0 : index
    %c0_120 = arith.constant 0 : index
    %c0_121 = arith.constant 0 : index
    %192 = vector.load %arg22[%c0_119, %c0_120, %c0_121] : memref<1x32x64xbf16, #tpu.memory_space<vmem>>, vector<1x32x64xbf16>
    %193 = vector.shape_cast %192 : vector<1x32x64xbf16> to vector<32x64xbf16>
    %cst_122 = arith.constant dense<0.000000e+00> : vector<8x32xf32>
    %194 = tpu.matmul %191, %193, %cst_122 {dimension_numbers = #tpu.dot_dimension_numbers<[1], [1], [0], [0], [0, 0, 1, 0], [], []>} : vector<8x64xbf16>, vector<32x64xbf16>, vector<8x32xf32> -> vector<8x32xf32>
    %c0_123 = arith.constant 0 : index
    %c0_124 = arith.constant 0 : index
    %c0_125 = arith.constant 0 : index
    %195 = vector.load %arg23[%c0_123, %c0_124, %c0_125] : memref<1x1x32xf32, #tpu.memory_space<vmem>>, vector<1x1x32xf32>
    %196 = vector.shape_cast %195 : vector<1x1x32xf32> to vector<1x32xf32>
    %197 = vector.broadcast %196 : vector<1x32xf32> to vector<8x32xf32>
    %198 = arith.addf %194, %197 : vector<8x32xf32>
    %199 = arith.addf %145, %198 : vector<8x32xf32>
    %c0_126 = arith.constant 0 : index
    %c0_127 = arith.constant 0 : index
    %200 = vector.load %arg25[%c0_126, %c0_127] : memref<8x32xf32, #tpu.memory_space<vmem>>, vector<8x32xf32>
    tpu.vector_store %arg25[%c0_126, %c0_127], %199 {strides = array<i32>} : memref<8x32xf32, #tpu.memory_space<vmem>>, vector<8x32xf32>,
    %c1_i32 = arith.constant 1 : i32
    %201 = arith.cmpi eq, %arg1, %c1_i32 : i32
    %202 = arith.extui %201 : i1 to i32
    %c0_i32_128 = arith.constant 0 : i32
    %203 = arith.cmpi ne, %202, %c0_i32_128 : i32
    scf.if %203 {
      %cst_129 = arith.constant dense<0.000000e+00> : vector<8xf32>
      %204 = vector.multi_reduction <add>, %199, %cst_129 [1] : vector<8x32xf32> to vector<8xf32>
      %205 = vector.shape_cast %204 : vector<8xf32> to vector<8x1xf32>
      %cst_130 = arith.constant 3.200000e+01 : f32
      %206 = vector.broadcast %cst_130 : f32 to vector<8x1xf32>
      %207 = arith.divf %205, %206 : vector<8x1xf32>
      %208 = vector.broadcast %207 : vector<8x1xf32> to vector<8x32xf32>
      %209 = arith.subf %199, %208 : vector<8x32xf32>
      %210 = arith.mulf %209, %209 : vector<8x32xf32>
      %cst_131 = arith.constant dense<0.000000e+00> : vector<8xf32>
      %211 = vector.multi_reduction <add>, %210, %cst_131 [1] : vector<8x32xf32> to vector<8xf32>
      %212 = vector.shape_cast %211 : vector<8xf32> to vector<8x1xf32>
      %cst_132 = arith.constant 3.200000e+01 : f32
      %213 = vector.broadcast %cst_132 : f32 to vector<8x1xf32>
      %214 = arith.divf %212, %213 : vector<8x1xf32>
      %cst_133 = arith.constant 9.99999974E-6 : f32
      %215 = vector.broadcast %cst_133 : f32 to vector<8x1xf32>
      %216 = arith.addf %214, %215 : vector<8x1xf32>
      %217 = math.rsqrt %216 : vector<8x1xf32>
      %218 = vector.broadcast %217 : vector<8x1xf32> to vector<8x32xf32>
      %219 = arith.mulf %209, %218 : vector<8x32xf32>
      %c0_134 = arith.constant 0 : index
      %c0_135 = arith.constant 0 : index
      %220 = vector.load %arg6[%c0_134, %c0_135] : memref<1x32xf32, #tpu.memory_space<vmem>>, vector<1x32xf32>
      %221 = vector.broadcast %220 : vector<1x32xf32> to vector<8x32xf32>
      %222 = arith.mulf %219, %221 : vector<8x32xf32>
      %c0_136 = arith.constant 0 : index
      %c0_137 = arith.constant 0 : index
      %223 = vector.load %arg7[%c0_136, %c0_137] : memref<1x32xf32, #tpu.memory_space<vmem>>, vector<1x32xf32>
      %224 = vector.broadcast %223 : vector<1x32xf32> to vector<8x32xf32>
      %225 = arith.addf %222, %224 : vector<8x32xf32>
      %c0_138 = arith.constant 0 : index
      %c0_139 = arith.constant 0 : index
      %c0_140 = arith.constant 0 : index
      %226 = vector.load %arg24[%c0_138, %c0_139, %c0_140] : memref<1x8x32xf32, #tpu.memory_space<vmem>>, vector<1x8x32xf32>
      %227 = vector.shape_cast %226 : vector<1x8x32xf32> to vector<8x32xf32>
      %228 = vector.shape_cast %225 : vector<8x32xf32> to vector<1x8x32xf32>
      tpu.vector_store %arg24[%c0_138, %c0_139, %c0_140], %228 {strides = array<i32>} : memref<1x8x32xf32, #tpu.memory_space<vmem>>, vector<1x8x32xf32>,
    } else {
    }
    return
  }
  func.func @transform_0(%arg0: i32, %arg1: i32) -> (i32, i32, i32) {
    %c0_i32 = arith.constant 0 : i32
    %c0_i32_0 = arith.constant 0 : i32
    %c0_i32_1 = arith.constant 0 : i32
    return %arg0, %c0_i32, %c0_i32_0 : i32, i32, i32
  }
  func.func @transform_1(%arg0: i32, %arg1: i32) -> (i32, i32, i32) {
    %c0_i32 = arith.constant 0 : i32
    %c0_i32_0 = arith.constant 0 : i32
    %c0_i32_1 = arith.constant 0 : i32
    return %arg0, %c0_i32, %c0_i32_0 : i32, i32, i32
  }
  func.func @transform_2(%arg0: i32, %arg1: i32) -> (i32, i32) {
    %c0_i32 = arith.constant 0 : i32
    %c0_i32_0 = arith.constant 0 : i32
    %c0_i32_1 = arith.constant 0 : i32
    return %c0_i32, %c0_i32_0 : i32, i32
  }
  func.func @transform_3(%arg0: i32, %arg1: i32) -> (i32, i32) {
    %c0_i32 = arith.constant 0 : i32
    %c0_i32_0 = arith.constant 0 : i32
    %c0_i32_1 = arith.constant 0 : i32
    return %c0_i32, %c0_i32_0 : i32, i32
  }
  func.func @transform_4(%arg0: i32, %arg1: i32) -> (i32, i32) {
    %c0_i32 = arith.constant 0 : i32
    %c0_i32_0 = arith.constant 0 : i32
    %c0_i32_1 = arith.constant 0 : i32
    return %c0_i32, %c0_i32_0 : i32, i32
  }
  func.func @transform_5(%arg0: i32, %arg1: i32) -> (i32, i32) {
    %c0_i32 = arith.constant 0 : i32
    %c0_i32_0 = arith.constant 0 : i32
    %c0_i32_1 = arith.constant 0 : i32
    return %c0_i32, %c0_i32_0 : i32, i32
  }
  func.func @transform_6(%arg0: i32, %arg1: i32) -> (i32, i32, i32) {
    %c0_i32 = arith.constant 0 : i32
    %c0_i32_0 = arith.constant 0 : i32
    %c0_i32_1 = arith.constant 0 : i32
    return %arg1, %c0_i32, %c0_i32_0 : i32, i32, i32
  }
  func.func @transform_7(%arg0: i32, %arg1: i32) -> (i32, i32, i32) {
    %c0_i32 = arith.constant 0 : i32
    %c0_i32_0 = arith.constant 0 : i32
    %c0_i32_1 = arith.constant 0 : i32
    return %arg1, %c0_i32, %c0_i32_0 : i32, i32, i32
  }
  func.func @transform_8(%arg0: i32, %arg1: i32) -> (i32, i32, i32) {
    %c0_i32 = arith.constant 0 : i32
    %c0_i32_0 = arith.constant 0 : i32
    %c0_i32_1 = arith.constant 0 : i32
    return %arg1, %c0_i32, %c0_i32_0 : i32, i32, i32
  }
  func.func @transform_9(%arg0: i32, %arg1: i32) -> (i32, i32, i32) {
    %c0_i32 = arith.constant 0 : i32
    %c0_i32_0 = arith.constant 0 : i32
    %c0_i32_1 = arith.constant 0 : i32
    return %arg1, %c0_i32, %c0_i32_0 : i32, i32, i32
  }
  func.func @transform_10(%arg0: i32, %arg1: i32) -> (i32, i32, i32) {
    %c0_i32 = arith.constant 0 : i32
    %c0_i32_0 = arith.constant 0 : i32
    %c0_i32_1 = arith.constant 0 : i32
    return %arg1, %c0_i32, %c0_i32_0 : i32, i32, i32
  }
  func.func @transform_11(%arg0: i32, %arg1: i32) -> (i32, i32, i32) {
    %c0_i32 = arith.constant 0 : i32
    %c0_i32_0 = arith.constant 0 : i32
    %c0_i32_1 = arith.constant 0 : i32
    return %arg1, %c0_i32, %c0_i32_0 : i32, i32, i32
  }
  func.func @transform_12(%arg0: i32, %arg1: i32) -> (i32, i32, i32) {
    %c0_i32 = arith.constant 0 : i32
    %c0_i32_0 = arith.constant 0 : i32
    %c0_i32_1 = arith.constant 0 : i32
    return %arg1, %c0_i32, %c0_i32_0 : i32, i32, i32
  }
  func.func @transform_13(%arg0: i32, %arg1: i32) -> (i32, i32, i32) {
    %c0_i32 = arith.constant 0 : i32
    %c0_i32_0 = arith.constant 0 : i32
    %c0_i32_1 = arith.constant 0 : i32
    return %arg1, %c0_i32, %c0_i32_0 : i32, i32, i32
  }
  func.func @transform_14(%arg0: i32, %arg1: i32) -> (i32, i32, i32) {
    %c0_i32 = arith.constant 0 : i32
    %c0_i32_0 = arith.constant 0 : i32
    %c0_i32_1 = arith.constant 0 : i32
    return %arg1, %c0_i32, %c0_i32_0 : i32, i32, i32
  }
  func.func @transform_15(%arg0: i32, %arg1: i32) -> (i32, i32, i32) {
    %c0_i32 = arith.constant 0 : i32
    %c0_i32_0 = arith.constant 0 : i32
    %c0_i32_1 = arith.constant 0 : i32
    return %arg1, %c0_i32, %c0_i32_0 : i32, i32, i32
  }
  func.func @transform_16(%arg0: i32, %arg1: i32) -> (i32, i32, i32) {
    %c0_i32 = arith.constant 0 : i32
    %c0_i32_0 = arith.constant 0 : i32
    %c0_i32_1 = arith.constant 0 : i32
    return %arg1, %c0_i32, %c0_i32_0 : i32, i32, i32
  }
  func.func @transform_17(%arg0: i32, %arg1: i32) -> (i32, i32, i32) {
    %c0_i32 = arith.constant 0 : i32
    %c0_i32_0 = arith.constant 0 : i32
    %c0_i32_1 = arith.constant 0 : i32
    return %arg1, %c0_i32, %c0_i32_0 : i32, i32, i32
  }
  func.func @transform_18(%arg0: i32, %arg1: i32) -> (i32, i32, i32) {
    %c0_i32 = arith.constant 0 : i32
    %c0_i32_0 = arith.constant 0 : i32
    %c0_i32_1 = arith.constant 0 : i32
    return %arg1, %c0_i32, %c0_i32_0 : i32, i32, i32
  }
  func.func @transform_19(%arg0: i32, %arg1: i32) -> (i32, i32, i32) {
    %c0_i32 = arith.constant 0 : i32
    %c0_i32_0 = arith.constant 0 : i32
    %c0_i32_1 = arith.constant 0 : i32
    return %arg1, %c0_i32, %c0_i32_0 : i32, i32, i32
  }
  func.func @transform_20(%arg0: i32, %arg1: i32) -> (i32, i32, i32) {
    %c0_i32 = arith.constant 0 : i32
    %c0_i32_0 = arith.constant 0 : i32
    %c0_i32_1 = arith.constant 0 : i32
    return %arg1, %c0_i32, %c0_i32_0 : i32, i32, i32
  }
  func.func @transform_21(%arg0: i32, %arg1: i32) -> (i32, i32, i32) {
    %c0_i32 = arith.constant 0 : i32
    %c0_i32_0 = arith.constant 0 : i32
    %c0_i32_1 = arith.constant 0 : i32
    return %arg1, %c0_i32, %c0_i32_0 : i32, i32, i32
  }
  func.func @transform_22(%arg0: i32, %arg1: i32) -> (i32, i32, i32) {
    %c0_i32 = arith.constant 0 : i32
    %c0_i32_0 = arith.constant 0 : i32
    %c0_i32_1 = arith.constant 0 : i32
    return %arg0, %c0_i32, %c0_i32_0 : i32, i32, i32
  }
}

</mosaic_0001>

<llo_original>
// kernel: _lambda_.1
$region0: #{_lambda_.1}
  #allocation0 [shape = 'u32[]', space=smem, size = 0x4, offset = 0x4, fixed_abs, tag = 'smem constant byte address 0x4 - core index']
  #allocation1 [shape = 'u32[144,128]{1,0:T(1,128)}', space=vmem, size = 0x12000, scoped, tag = 'internal scratch']
  #allocation2 [shape = 'f32[8,32]{1,0:T(8,128)}', space=vmem, size = 0x1000, scoped, tag = 'scratch operand']
  #allocation3 [shape = 'f32[4,8,8]{2,1,0:T(8,128)}', space=vmem, size = 0x4000, scoped, tag = 'scratch operand']
  #allocation4 [shape = 'f32[4,8,8]{2,1,0:T(8,128)}', space=vmem, size = 0x4000, scoped, tag = 'scratch operand']
  #allocation5 [shape = 'f32[4,8,8]{2,1,0:T(8,128)}', space=vmem, size = 0x4000, scoped, tag = 'scratch operand']
  #allocation6 [shape = 'f32[8,32]{1,0:T(8,128)}', space=vmem, size = 0x1000, scoped, tag = 'scratch operand']
  %s0 = inlined_call_operand.vmem [shape: f32[2,8,32], index: 0, kind: input, shape index: {}]
  %s1 = inlined_call_operand.vmem [shape: f32[2,1,8], index: 1, kind: input, shape index: {}]
  %s2 = inlined_call_operand.vmem [shape: f32[1,32], index: 2, kind: input, shape index: {}]
  %s3 = inlined_call_operand.vmem [shape: f32[1,32], index: 3, kind: input, shape index: {}]
  %s4 = inlined_call_operand.vmem [shape: f32[1,32], index: 4, kind: input, shape index: {}]
  %s5 = inlined_call_operand.vmem [shape: f32[1,32], index: 5, kind: input, shape index: {}]
  %s6 = inlined_call_operand.vmem [shape: f32[2,1,32], index: 6, kind: input, shape index: {}]
  %s7 = inlined_call_operand.vmem [shape: f32[2,1,32], index: 7, kind: input, shape index: {}]
  %s8 = inlined_call_operand.vmem [shape: bf16[2,32,32], index: 8, kind: input, shape index: {}]
  %s9 = inlined_call_operand.vmem [shape: f32[2,1,32], index: 9, kind: input, shape index: {}]
  %s10 = inlined_call_operand.vmem [shape: bf16[2,32,32], index: 10, kind: input, shape index: {}]
  %s11 = inlined_call_operand.vmem [shape: f32[2,1,32], index: 11, kind: input, shape index: {}]
  %s12 = inlined_call_operand.vmem [shape: bf16[2,32,32], index: 12, kind: input, shape index: {}]
  %s13 = inlined_call_operand.vmem [shape: f32[2,1,32], index: 13, kind: input, shape index: {}]
  %s14 = inlined_call_operand.vmem [shape: bf16[2,32,32], index: 14, kind: input, shape index: {}]
  %s15 = inlined_call_operand.vmem [shape: f32[2,1,32], index: 15, kind: input, shape index: {}]
  %s16 = inlined_call_operand.vmem [shape: f32[2,1,32], index: 16, kind: input, shape index: {}]
  %s17 = inlined_call_operand.vmem [shape: f32[2,1,32], index: 17, kind: input, shape index: {}]
  %s18 = inlined_call_operand.vmem [shape: bf16[2,64,32], index: 18, kind: input, shape index: {}]
  %s19 = inlined_call_operand.vmem [shape: f32[2,1,64], index: 19, kind: input, shape index: {}]
  %s20 = inlined_call_operand.vmem [shape: bf16[2,32,64], index: 20, kind: input, shape index: {}]
  %s21 = inlined_call_operand.vmem [shape: f32[2,1,32], index: 21, kind: input, shape index: {}]
  %s22 = inlined_call_operand.hbm [shape: f32[2,8,32], index: 22, kind: output, shape index: {}]
  %s23 = sld [smem:[#allocation0]]
  $region129: #{_lambda_.1} parent=0
    _
  %s25 = ssub.s32 1, %s23
  %s26 = scalar_select 0, %s25, %s23
  $region1: #{_lambda_.1} parent=0
    #allocation7 [shape = 'u8[8192]{0}', space=vmem, size = 0x2000, scoped, tag = 'output window, operand 0']
    #allocation8 [shape = 's32[2]{0}', space=sflag, size = 0x8, scoped, tag = 'scoped memory for _lambda_.1']
    %27 = vsyncpa [#allocation8], 0
    %s28 = scalar_lea.sflag [#allocation8], 1
    %29 = vsyncpa %s28, 0
    loop: start=0, step=1, limit=6
    $region2: #{_lambda_.1} parent=1 // loop_pre_header
      _
    $region3: #{_lambda_.1} parent=1 // loop_header
      %s31 = sphi 0, %s35
      %p32 = scmp.ge.s32.totalorder %s31, 6
      %s38 = sphi 0, %s50
      %s39 = sphi 0, %s46
      %s40 = sphi 0, %s38
      %s41 = sphi 0, %s39
      %s42 = sphi 0, %s40
      %s43 = sphi 0, %s41
      %s53 = sphi 0, %s55
      %s56 = sphi 0, %s53
      %s57 = sphi 0, %s56
      %s73 = sphi 0, %s57
      %s79 = sphi 0, %s81
      %s82 = sphi 0, %s79
      %s83 = sphi 0, %s82
      %s99 = sphi 0, %s83
      %s103 = sphi 0, %s103
      %s105 = sphi 0, %s103
      %s106 = sphi 0, %s105
      %s120 = sphi 0, %s106
      %s124 = sphi 0, %s124
      %s126 = sphi 0, %s124
      %s127 = sphi 0, %s126
      %s141 = sphi 0, %s127
      %s145 = sphi 0, %s145
      %s147 = sphi 0, %s145
      %s148 = sphi 0, %s147
      %s162 = sphi 0, %s148
      %s166 = sphi 0, %s166
      %s168 = sphi 0, %s166
      %s169 = sphi 0, %s168
      %s183 = sphi 0, %s169
      %s189 = sphi 0, %s191
      %s192 = sphi 0, %s189
      %s193 = sphi 0, %s192
      %s209 = sphi 0, %s193
      %s215 = sphi 0, %s217
      %s218 = sphi 0, %s215
      %s219 = sphi 0, %s218
      %s235 = sphi 0, %s219
      %s241 = sphi 0, %s243
      %s244 = sphi 0, %s241
      %s245 = sphi 0, %s244
      %s261 = sphi 0, %s245
      %s267 = sphi 0, %s269
      %s270 = sphi 0, %s267
      %s271 = sphi 0, %s270
      %s287 = sphi 0, %s271
      %s293 = sphi 0, %s295
      %s296 = sphi 0, %s293
      %s297 = sphi 0, %s296
      %s313 = sphi 0, %s297
      %s319 = sphi 0, %s321
      %s322 = sphi 0, %s319
      %s323 = sphi 0, %s322
      %s339 = sphi 0, %s323
      %s345 = sphi 0, %s347
      %s348 = sphi 0, %s345
      %s349 = sphi 0, %s348
      %s365 = sphi 0, %s349
      %s371 = sphi 0, %s373
      %s374 = sphi 0, %s371
      %s375 = sphi 0, %s374
      %s391 = sphi 0, %s375
      %s397 = sphi 0, %s399
      %s400 = sphi 0, %s397
      %s401 = sphi 0, %s400
      %s417 = sphi 0, %s401
      %s423 = sphi 0, %s425
      %s426 = sphi 0, %s423
      %s427 = sphi 0, %s426
      %s443 = sphi 0, %s427
      %s449 = sphi 0, %s451
      %s452 = sphi 0, %s449
      %s453 = sphi 0, %s452
      %s469 = sphi 0, %s453
      %s475 = sphi 0, %s477
      %s478 = sphi 0, %s475
      %s479 = sphi 0, %s478
      %s495 = sphi 0, %s479
      %s501 = sphi 0, %s503
      %s504 = sphi 0, %s501
      %s505 = sphi 0, %s504
      %s521 = sphi 0, %s505
      %s527 = sphi 0, %s529
      %s530 = sphi 0, %s527
      %s531 = sphi 0, %s530
      %s547 = sphi 0, %s531
      %s553 = sphi 0, %s555
      %s556 = sphi 0, %s553
      %s557 = sphi 0, %s556
      %s573 = sphi 0, %s557
      %s579 = sphi 0, %s581
      %s582 = sphi 0, %s579
      %s583 = sphi 0, %s582
      %s599 = sphi 0, %s583
      %s605 = sphi 0, %s607
      %s608 = sphi 0, %s605
      %s609 = sphi 0, %s608
      %s625 = sphi 0, %s609
    $region4: #{_lambda_.1} parent=1 // loop_header_branch
      %34 = sbr.rel (%p32) target = $region8
    $region5: #{_lambda_.1} parent=1 // loop_body
      %s36 = ssub.s32 %s31, 1
      %s37 = ssub.s32 %s31, 2
      %s44 = sadd.s32 1, %s39
      %p45 = scmp.ge.s32.totalorder %s44, 2
      %s46 = scalar_select %p45, 0, %s44
      %s47 = sadd.s32 1, %s38
      %s48 = scalar_select %p45, %s47, %s38
      %p49 = scmp.ge.s32.totalorder %s48, 2
      %s50 = scalar_select %p49, 0, %s48
      %s51 = ssub.s32 %s38, %s50
      %p52 = scmp.eq.s32.totalorder %s51, 0
      %s54 = sadd.s32 %s53, 1
      %s55 = scalar_select %p52, %s53, %s54
      %p58 = pneg %p52
      %p59 = scmp.eq.s32.totalorder %s31, 3
      %p60 = por %p58, %p59
      %p61 = scmp.ne.s32.totalorder %s53, %s56
      %p62 = scmp.eq.s32.totalorder %s31, 0
      %p63 = por %p61, %p62
      %p64 = scmp.ne.s32.totalorder %s53, %s56
      %p65 = scmp.eq.s32.totalorder %s36, 3
      %p66 = por %p64, %p65
      %p67 = scmp.ne.s32.totalorder %s56, %s57
      %p68 = scmp.eq.s32.totalorder %s36, 0
      %p69 = por %p67, %p68
      %p70 = scmp.ne.s32.totalorder %s56, %s57
      %p71 = scmp.eq.s32.totalorder %s37, 3
      %p72 = por %p70, %p71
      %p74 = scmp.ne.s32.totalorder %s57, %s73
      %p75 = scmp.eq.s32.totalorder %s37, 0
      %p76 = por %p74, %p75
      %s77 = ssub.s32 %s38, %s50
      %p78 = scmp.eq.s32.totalorder %s77, 0
      %s80 = sadd.s32 %s79, 1
      %s81 = scalar_select %p78, %s79, %s80
      %p84 = pneg %p78
      %p85 = scmp.eq.s32.totalorder %s31, 3
      %p86 = por %p84, %p85
      %p87 = scmp.ne.s32.totalorder %s79, %s82
      %p88 = scmp.eq.s32.totalorder %s31, 0
      %p89 = por %p87, %p88
      %p90 = scmp.ne.s32.totalorder %s79, %s82
      %p91 = scmp.eq.s32.totalorder %s36, 3
      %p92 = por %p90, %p91
      %p93 = scmp.ne.s32.totalorder %s82, %s83
      %p94 = scmp.eq.s32.totalorder %s36, 0
      %p95 = por %p93, %p94
      %p96 = scmp.ne.s32.totalorder %s82, %s83
      %p97 = scmp.eq.s32.totalorder %s37, 3
      %p98 = por %p96, %p97
      %p100 = scmp.ne.s32.totalorder %s83, %s99
      %p101 = scmp.eq.s32.totalorder %s37, 0
      %p102 = por %p100, %p101
      %s104 = sadd.s32 %s103, 1
      %p107 = scmp.eq.s32.totalorder %s31, 3
      %p108 = scmp.ne.s32.totalorder %s103, %s105
      %p109 = scmp.eq.s32.totalorder %s31, 0
      %p110 = por %p108, %p109
      %p111 = scmp.ne.s32.totalorder %s103, %s105
      %p112 = scmp.eq.s32.totalorder %s36, 3
      %p113 = por %p111, %p112
      %p114 = scmp.ne.s32.totalorder %s105, %s106
      %p115 = scmp.eq.s32.totalorder %s36, 0
      %p116 = por %p114, %p115
      %p117 = scmp.ne.s32.totalorder %s105, %s106
      %p118 = scmp.eq.s32.totalorder %s37, 3
      %p119 = por %p117, %p118
      %p121 = scmp.ne.s32.totalorder %s106, %s120
      %p122 = scmp.eq.s32.totalorder %s37, 0
      %p123 = por %p121, %p122
      %s125 = sadd.s32 %s124, 1
      %p128 = scmp.eq.s32.totalorder %s31, 3
      %p129 = scmp.ne.s32.totalorder %s124, %s126
      %p130 = scmp.eq.s32.totalorder %s31, 0
      %p131 = por %p129, %p130
      %p132 = scmp.ne.s32.totalorder %s124, %s126
      %p133 = scmp.eq.s32.totalorder %s36, 3
      %p134 = por %p132, %p133
      %p135 = scmp.ne.s32.totalorder %s126, %s127
      %p136 = scmp.eq.s32.totalorder %s36, 0
      %p137 = por %p135, %p136
      %p138 = scmp.ne.s32.totalorder %s126, %s127
      %p139 = scmp.eq.s32.totalorder %s37, 3
      %p140 = por %p138, %p139
      %p142 = scmp.ne.s32.totalorder %s127, %s141
      %p143 = scmp.eq.s32.totalorder %s37, 0
      %p144 = por %p142, %p143
      %s146 = sadd.s32 %s145, 1
      %p149 = scmp.eq.s32.totalorder %s31, 3
      %p150 = scmp.ne.s32.totalorder %s145, %s147
      %p151 = scmp.eq.s32.totalorder %s31, 0
      %p152 = por %p150, %p151
      %p153 = scmp.ne.s32.totalorder %s145, %s147
      %p154 = scmp.eq.s32.totalorder %s36, 3
      %p155 = por %p153, %p154
      %p156 = scmp.ne.s32.totalorder %s147, %s148
      %p157 = scmp.eq.s32.totalorder %s36, 0
      %p158 = por %p156, %p157
      %p159 = scmp.ne.s32.totalorder %s147, %s148
      %p160 = scmp.eq.s32.totalorder %s37, 3
      %p161 = por %p159, %p160
      %p163 = scmp.ne.s32.totalorder %s148, %s162
      %p164 = scmp.eq.s32.totalorder %s37, 0
      %p165 = por %p163, %p164
      %s167 = sadd.s32 %s166, 1
      %p170 = scmp.eq.s32.totalorder %s31, 3
      %p171 = scmp.ne.s32.totalorder %s166, %s168
      %p172 = scmp.eq.s32.totalorder %s31, 0
      %p173 = por %p171, %p172
      %p174 = scmp.ne.s32.totalorder %s166, %s168
      %p175 = scmp.eq.s32.totalorder %s36, 3
      %p176 = por %p174, %p175
      %p177 = scmp.ne.s32.totalorder %s168, %s169
      %p178 = scmp.eq.s32.totalorder %s36, 0
      %p179 = por %p177, %p178
      %p180 = scmp.ne.s32.totalorder %s168, %s169
      %p181 = scmp.eq.s32.totalorder %s37, 3
      %p182 = por %p180, %p181
      %p184 = scmp.ne.s32.totalorder %s169, %s183
      %p185 = scmp.eq.s32.totalorder %s37, 0
      %p186 = por %p184, %p185
      %s187 = ssub.s32 %s39, %s46
      %p188 = scmp.eq.s32.totalorder %s187, 0
      %s190 = sadd.s32 %s189, 1
      %s191 = scalar_select %p188, %s189, %s190
      %p194 = pneg %p188
      %p195 = scmp.eq.s32.totalorder %s31, 3
      %p196 = por %p194, %p195
      %p197 = scmp.ne.s32.totalorder %s189, %s192
      %p198 = scmp.eq.s32.totalorder %s31, 0
      %p199 = por %p197, %p198
      %p200 = scmp.ne.s32.totalorder %s189, %s192
      %p201 = scmp.eq.s32.totalorder %s36, 3
      %p202 = por %p200, %p201
      %p203 = scmp.ne.s32.totalorder %s192, %s193
      %p204 = scmp.eq.s32.totalorder %s36, 0
      %p205 = por %p203, %p204
      %p206 = scmp.ne.s32.totalorder %s192, %s193
      %p207 = scmp.eq.s32.totalorder %s37, 3
      %p208 = por %p206, %p207
      %p210 = scmp.ne.s32.totalorder %s193, %s209
      %p211 = scmp.eq.s32.totalorder %s37, 0
      %p212 = por %p210, %p211
      %s213 = ssub.s32 %s39, %s46
      %p214 = scmp.eq.s32.totalorder %s213, 0
      %s216 = sadd.s32 %s215, 1
      %s217 = scalar_select %p214, %s215, %s216
      %p220 = pneg %p214
      %p221 = scmp.eq.s32.totalorder %s31, 3
      %p222 = por %p220, %p221
      %p223 = scmp.ne.s32.totalorder %s215, %s218
      %p224 = scmp.eq.s32.totalorder %s31, 0
      %p225 = por %p223, %p224
      %p226 = scmp.ne.s32.totalorder %s215, %s218
      %p227 = scmp.eq.s32.totalorder %s36, 3
      %p228 = por %p226, %p227
      %p229 = scmp.ne.s32.totalorder %s218, %s219
      %p230 = scmp.eq.s32.totalorder %s36, 0
      %p231 = por %p229, %p230
      %p232 = scmp.ne.s32.totalorder %s218, %s219
      %p233 = scmp.eq.s32.totalorder %s37, 3
      %p234 = por %p232, %p233
      %p236 = scmp.ne.s32.totalorder %s219, %s235
      %p237 = scmp.eq.s32.totalorder %s37, 0
      %p238 = por %p236, %p237
      %s239 = ssub.s32 %s39, %s46
      %p240 = scmp.eq.s32.totalorder %s239, 0
      %s242 = sadd.s32 %s241, 1
      %s243 = scalar_select %p240, %s241, %s242
      %p246 = pneg %p240
      %p247 = scmp.eq.s32.totalorder %s31, 3
      %p248 = por %p246, %p247
      %p249 = scmp.ne.s32.totalorder %s241, %s244
      %p250 = scmp.eq.s32.totalorder %s31, 0
      %p251 = por %p249, %p250
      %p252 = scmp.ne.s32.totalorder %s241, %s244
      %p253 = scmp.eq.s32.totalorder %s36, 3
      %p254 = por %p252, %p253
      %p255 = scmp.ne.s32.totalorder %s244, %s245
      %p256 = scmp.eq.s32.totalorder %s36, 0
      %p257 = por %p255, %p256
      %p258 = scmp.ne.s32.totalorder %s244, %s245
      %p259 = scmp.eq.s32.totalorder %s37, 3
      %p260 = por %p258, %p259
      %p262 = scmp.ne.s32.totalorder %s245, %s261
      %p263 = scmp.eq.s32.totalorder %s37, 0
      %p264 = por %p262, %p263
      %s265 = ssub.s32 %s39, %s46
      %p266 = scmp.eq.s32.totalorder %s265, 0
      %s268 = sadd.s32 %s267, 1
      %s269 = scalar_select %p266, %s267, %s268
      %p272 = pneg %p266
      %p273 = scmp.eq.s32.totalorder %s31, 3
      %p274 = por %p272, %p273
      %p275 = scmp.ne.s32.totalorder %s267, %s270
      %p276 = scmp.eq.s32.totalorder %s31, 0
      %p277 = por %p275, %p276
      %p278 = scmp.ne.s32.totalorder %s267, %s270
      %p279 = scmp.eq.s32.totalorder %s36, 3
      %p280 = por %p278, %p279
      %p281 = scmp.ne.s32.totalorder %s270, %s271
      %p282 = scmp.eq.s32.totalorder %s36, 0
      %p283 = por %p281, %p282
      %p284 = scmp.ne.s32.totalorder %s270, %s271
      %p285 = scmp.eq.s32.totalorder %s37, 3
      %p286 = por %p284, %p285
      %p288 = scmp.ne.s32.totalorder %s271, %s287
      %p289 = scmp.eq.s32.totalorder %s37, 0
      %p290 = por %p288, %p289
      %s291 = ssub.s32 %s39, %s46
      %p292 = scmp.eq.s32.totalorder %s291, 0
      %s294 = sadd.s32 %s293, 1
      %s295 = scalar_select %p292, %s293, %s294
      %p298 = pneg %p292
      %p299 = scmp.eq.s32.totalorder %s31, 3
      %p300 = por %p298, %p299
      %p301 = scmp.ne.s32.totalorder %s293, %s296
      %p302 = scmp.eq.s32.totalorder %s31, 0
      %p303 = por %p301, %p302
      %p304 = scmp.ne.s32.totalorder %s293, %s296
      %p305 = scmp.eq.s32.totalorder %s36, 3
      %p306 = por %p304, %p305
      %p307 = scmp.ne.s32.totalorder %s296, %s297
      %p308 = scmp.eq.s32.totalorder %s36, 0
      %p309 = por %p307, %p308
      %p310 = scmp.ne.s32.totalorder %s296, %s297
      %p311 = scmp.eq.s32.totalorder %s37, 3
      %p312 = por %p310, %p311
      %p314 = scmp.ne.s32.totalorder %s297, %s313
      %p315 = scmp.eq.s32.totalorder %s37, 0
      %p316 = por %p314, %p315
      %s317 = ssub.s32 %s39, %s46
      %p318 = scmp.eq.s32.totalorder %s317, 0
      %s320 = sadd.s32 %s319, 1
      %s321 = scalar_select %p318, %s319, %s320
      %p324 = pneg %p318
      %p325 = scmp.eq.s32.totalorder %s31, 3
      %p326 = por %p324, %p325
      %p327 = scmp.ne.s32.totalorder %s319, %s322
      %p328 = scmp.eq.s32.totalorder %s31, 0
      %p329 = por %p327, %p328
      %p330 = scmp.ne.s32.totalorder %s319, %s322
      %p331 = scmp.eq.s32.totalorder %s36, 3
      %p332 = por %p330, %p331
      %p333 = scmp.ne.s32.totalorder %s322, %s323
      %p334 = scmp.eq.s32.totalorder %s36, 0
      %p335 = por %p333, %p334
      %p336 = scmp.ne.s32.totalorder %s322, %s323
      %p337 = scmp.eq.s32.totalorder %s37, 3
      %p338 = por %p336, %p337
      %p340 = scmp.ne.s32.totalorder %s323, %s339
      %p341 = scmp.eq.s32.totalorder %s37, 0
      %p342 = por %p340, %p341
      %s343 = ssub.s32 %s39, %s46
      %p344 = scmp.eq.s32.totalorder %s343, 0
      %s346 = sadd.s32 %s345, 1
      %s347 = scalar_select %p344, %s345, %s346
      %p350 = pneg %p344
      %p351 = scmp.eq.s32.totalorder %s31, 3
      %p352 = por %p350, %p351
      %p353 = scmp.ne.s32.totalorder %s345, %s348
      %p354 = scmp.eq.s32.totalorder %s31, 0
      %p355 = por %p353, %p354
      %p356 = scmp.ne.s32.totalorder %s345, %s348
      %p357 = scmp.eq.s32.totalorder %s36, 3
      %p358 = por %p356, %p357
      %p359 = scmp.ne.s32.totalorder %s348, %s349
      %p360 = scmp.eq.s32.totalorder %s36, 0
      %p361 = por %p359, %p360
      %p362 = scmp.ne.s32.totalorder %s348, %s349
      %p363 = scmp.eq.s32.totalorder %s37, 3
      %p364 = por %p362, %p363
      %p366 = scmp.ne.s32.totalorder %s349, %s365
      %p367 = scmp.eq.s32.totalorder %s37, 0
      %p368 = por %p366, %p367
      %s369 = ssub.s32 %s39, %s46
      %p370 = scmp.eq.s32.totalorder %s369, 0
      %s372 = sadd.s32 %s371, 1
      %s373 = scalar_select %p370, %s371, %s372
      %p376 = pneg %p370
      %p377 = scmp.eq.s32.totalorder %s31, 3
      %p378 = por %p376, %p377
      %p379 = scmp.ne.s32.totalorder %s371, %s374
      %p380 = scmp.eq.s32.totalorder %s31, 0
      %p381 = por %p379, %p380
      %p382 = scmp.ne.s32.totalorder %s371, %s374
      %p383 = scmp.eq.s32.totalorder %s36, 3
      %p384 = por %p382, %p383
      %p385 = scmp.ne.s32.totalorder %s374, %s375
      %p386 = scmp.eq.s32.totalorder %s36, 0
      %p387 = por %p385, %p386
      %p388 = scmp.ne.s32.totalorder %s374, %s375
      %p389 = scmp.eq.s32.totalorder %s37, 3
      %p390 = por %p388, %p389
      %p392 = scmp.ne.s32.totalorder %s375, %s391
      %p393 = scmp.eq.s32.totalorder %s37, 0
      %p394 = por %p392, %p393
      %s395 = ssub.s32 %s39, %s46
      %p396 = scmp.eq.s32.totalorder %s395, 0
      %s398 = sadd.s32 %s397, 1
      %s399 = scalar_select %p396, %s397, %s398
      %p402 = pneg %p396
      %p403 = scmp.eq.s32.totalorder %s31, 3
      %p404 = por %p402, %p403
      %p405 = scmp.ne.s32.totalorder %s397, %s400
      %p406 = scmp.eq.s32.totalorder %s31, 0
      %p407 = por %p405, %p406
      %p408 = scmp.ne.s32.totalorder %s397, %s400
      %p409 = scmp.eq.s32.totalorder %s36, 3
      %p410 = por %p408, %p409
      %p411 = scmp.ne.s32.totalorder %s400, %s401
      %p412 = scmp.eq.s32.totalorder %s36, 0
      %p413 = por %p411, %p412
      %p414 = scmp.ne.s32.totalorder %s400, %s401
      %p415 = scmp.eq.s32.totalorder %s37, 3
      %p416 = por %p414, %p415
      %p418 = scmp.ne.s32.totalorder %s401, %s417
      %p419 = scmp.eq.s32.totalorder %s37, 0
      %p420 = por %p418, %p419
      %s421 = ssub.s32 %s39, %s46
      %p422 = scmp.eq.s32.totalorder %s421, 0
      %s424 = sadd.s32 %s423, 1
      %s425 = scalar_select %p422, %s423, %s424
      %p428 = pneg %p422
      %p429 = scmp.eq.s32.totalorder %s31, 3
      %p430 = por %p428, %p429
      %p431 = scmp.ne.s32.totalorder %s423, %s426
      %p432 = scmp.eq.s32.totalorder %s31, 0
      %p433 = por %p431, %p432
      %p434 = scmp.ne.s32.totalorder %s423, %s426
      %p435 = scmp.eq.s32.totalorder %s36, 3
      %p436 = por %p434, %p435
      %p437 = scmp.ne.s32.totalorder %s426, %s427
      %p438 = scmp.eq.s32.totalorder %s36, 0
      %p439 = por %p437, %p438
      %p440 = scmp.ne.s32.totalorder %s426, %s427
      %p441 = scmp.eq.s32.totalorder %s37, 3
      %p442 = por %p440, %p441
      %p444 = scmp.ne.s32.totalorder %s427, %s443
      %p445 = scmp.eq.s32.totalorder %s37, 0
      %p446 = por %p444, %p445
      %s447 = ssub.s32 %s39, %s46
      %p448 = scmp.eq.s32.totalorder %s447, 0
      %s450 = sadd.s32 %s449, 1
      %s451 = scalar_select %p448, %s449, %s450
      %p454 = pneg %p448
      %p455 = scmp.eq.s32.totalorder %s31, 3
      %p456 = por %p454, %p455
      %p457 = scmp.ne.s32.totalorder %s449, %s452
      %p458 = scmp.eq.s32.totalorder %s31, 0
      %p459 = por %p457, %p458
      %p460 = scmp.ne.s32.totalorder %s449, %s452
      %p461 = scmp.eq.s32.totalorder %s36, 3
      %p462 = por %p460, %p461
      %p463 = scmp.ne.s32.totalorder %s452, %s453
      %p464 = scmp.eq.s32.totalorder %s36, 0
      %p465 = por %p463, %p464
      %p466 = scmp.ne.s32.totalorder %s452, %s453
      %p467 = scmp.eq.s32.totalorder %s37, 3
      %p468 = por %p466, %p467
      %p470 = scmp.ne.s32.totalorder %s453, %s469
      %p471 = scmp.eq.s32.totalorder %s37, 0
      %p472 = por %p470, %p471
      %s473 = ssub.s32 %s39, %s46
      %p474 = scmp.eq.s32.totalorder %s473, 0
      %s476 = sadd.s32 %s475, 1
      %s477 = scalar_select %p474, %s475, %s476
      %p480 = pneg %p474
      %p481 = scmp.eq.s32.totalorder %s31, 3
      %p482 = por %p480, %p481
      %p483 = scmp.ne.s32.totalorder %s475, %s478
      %p484 = scmp.eq.s32.totalorder %s31, 0
      %p485 = por %p483, %p484
      %p486 = scmp.ne.s32.totalorder %s475, %s478
      %p487 = scmp.eq.s32.totalorder %s36, 3
      %p488 = por %p486, %p487
      %p489 = scmp.ne.s32.totalorder %s478, %s479
      %p490 = scmp.eq.s32.totalorder %s36, 0
      %p491 = por %p489, %p490
      %p492 = scmp.ne.s32.totalorder %s478, %s479
      %p493 = scmp.eq.s32.totalorder %s37, 3
      %p494 = por %p492, %p493
      %p496 = scmp.ne.s32.totalorder %s479, %s495
      %p497 = scmp.eq.s32.totalorder %s37, 0
      %p498 = por %p496, %p497
      %s499 = ssub.s32 %s39, %s46
      %p500 = scmp.eq.s32.totalorder %s499, 0
      %s502 = sadd.s32 %s501, 1
      %s503 = scalar_select %p500, %s501, %s502
      %p506 = pneg %p500
      %p507 = scmp.eq.s32.totalorder %s31, 3
      %p508 = por %p506, %p507
      %p509 = scmp.ne.s32.totalorder %s501, %s504
      %p510 = scmp.eq.s32.totalorder %s31, 0
      %p511 = por %p509, %p510
      %p512 = scmp.ne.s32.totalorder %s501, %s504
      %p513 = scmp.eq.s32.totalorder %s36, 3
      %p514 = por %p512, %p513
      %p515 = scmp.ne.s32.totalorder %s504, %s505
      %p516 = scmp.eq.s32.totalorder %s36, 0
      %p517 = por %p515, %p516
      %p518 = scmp.ne.s32.totalorder %s504, %s505
      %p519 = scmp.eq.s32.totalorder %s37, 3
      %p520 = por %p518, %p519
      %p522 = scmp.ne.s32.totalorder %s505, %s521
      %p523 = scmp.eq.s32.totalorder %s37, 0
      %p524 = por %p522, %p523
      %s525 = ssub.s32 %s39, %s46
      %p526 = scmp.eq.s32.totalorder %s525, 0
      %s528 = sadd.s32 %s527, 1
      %s529 = scalar_select %p526, %s527, %s528
      %p532 = pneg %p526
      %p533 = scmp.eq.s32.totalorder %s31, 3
      %p534 = por %p532, %p533
      %p535 = scmp.ne.s32.totalorder %s527, %s530
      %p536 = scmp.eq.s32.totalorder %s31, 0
      %p537 = por %p535, %p536
      %p538 = scmp.ne.s32.totalorder %s527, %s530
      %p539 = scmp.eq.s32.totalorder %s36, 3
      %p540 = por %p538, %p539
      %p541 = scmp.ne.s32.totalorder %s530, %s531
      %p542 = scmp.eq.s32.totalorder %s36, 0
      %p543 = por %p541, %p542
      %p544 = scmp.ne.s32.totalorder %s530, %s531
      %p545 = scmp.eq.s32.totalorder %s37, 3
      %p546 = por %p544, %p545
      %p548 = scmp.ne.s32.totalorder %s531, %s547
      %p549 = scmp.eq.s32.totalorder %s37, 0
      %p550 = por %p548, %p549
      %s551 = ssub.s32 %s39, %s46
      %p552 = scmp.eq.s32.totalorder %s551, 0
      %s554 = sadd.s32 %s553, 1
      %s555 = scalar_select %p552, %s553, %s554
      %p558 = pneg %p552
      %p559 = scmp.eq.s32.totalorder %s31, 3
      %p560 = por %p558, %p559
      %p561 = scmp.ne.s32.totalorder %s553, %s556
      %p562 = scmp.eq.s32.totalorder %s31, 0
      %p563 = por %p561, %p562
      %p564 = scmp.ne.s32.totalorder %s553, %s556
      %p565 = scmp.eq.s32.totalorder %s36, 3
      %p566 = por %p564, %p565
      %p567 = scmp.ne.s32.totalorder %s556, %s557
      %p568 = scmp.eq.s32.totalorder %s36, 0
      %p569 = por %p567, %p568
      %p570 = scmp.ne.s32.totalorder %s556, %s557
      %p571 = scmp.eq.s32.totalorder %s37, 3
      %p572 = por %p570, %p571
      %p574 = scmp.ne.s32.totalorder %s557, %s573
      %p575 = scmp.eq.s32.totalorder %s37, 0
      %p576 = por %p574, %p575
      %s577 = ssub.s32 %s39, %s46
      %p578 = scmp.eq.s32.totalorder %s577, 0
      %s580 = sadd.s32 %s579, 1
      %s581 = scalar_select %p578, %s579, %s580
      %p584 = pneg %p578
      %p585 = scmp.eq.s32.totalorder %s31, 3
      %p586 = por %p584, %p585
      %p587 = scmp.ne.s32.totalorder %s579, %s582
      %p588 = scmp.eq.s32.totalorder %s31, 0
      %p589 = por %p587, %p588
      %p590 = scmp.ne.s32.totalorder %s579, %s582
      %p591 = scmp.eq.s32.totalorder %s36, 3
      %p592 = por %p590, %p591
      %p593 = scmp.ne.s32.totalorder %s582, %s583
      %p594 = scmp.eq.s32.totalorder %s36, 0
      %p595 = por %p593, %p594
      %p596 = scmp.ne.s32.totalorder %s582, %s583
      %p597 = scmp.eq.s32.totalorder %s37, 3
      %p598 = por %p596, %p597
      %p600 = scmp.ne.s32.totalorder %s583, %s599
      %p601 = scmp.eq.s32.totalorder %s37, 0
      %p602 = por %p600, %p601
      %s603 = ssub.s32 %s38, %s50
      %p604 = scmp.eq.s32.totalorder %s603, 0
      %s606 = sadd.s32 %s605, 1
      %s607 = scalar_select %p604, %s605, %s606
      %p610 = pneg %p604
      %p611 = scmp.eq.s32.totalorder %s31, 3
      %p612 = por %p610, %p611
      %p613 = scmp.ne.s32.totalorder %s605, %s608
      %p614 = scmp.eq.s32.totalorder %s31, 0
      %p615 = por %p613, %p614
      %p616 = scmp.ne.s32.totalorder %s605, %s608
      %p617 = scmp.eq.s32.totalorder %s36, 3
      %p618 = por %p616, %p617
      %p619 = scmp.ne.s32.totalorder %s608, %s609
      %p620 = scmp.eq.s32.totalorder %s36, 0
      %p621 = por %p619, %p620
      %p622 = scmp.ne.s32.totalorder %s608, %s609
      %p623 = scmp.eq.s32.totalorder %s37, 3
      %p624 = por %p622, %p623
      %p626 = scmp.ne.s32.totalorder %s609, %s625
      %p627 = scmp.eq.s32.totalorder %s37, 0
      %p628 = por %p626, %p627
      %p629 = scmp.le.s32.totalorder 1, %s31
      %p630 = scmp.lt.s32.totalorder %s31, 5
      %p631 = pnand %p629, %p630
      %p632 = pneg %p631
      // Predicated region
      $region9: #{_lambda_.1} parent=5 // pred_check
        _
      $region10: #{_lambda_.1} parent=5 // pred_check_branch
        %634 = sbr.rel (%p631) target = $region12
      $region11: #{_lambda_.1} parent=5 // pred_region
        %s635 = ssub.s32 %s31, 1
        // Predicated region
        $region13: #{_lambda_.1} parent=11 // pred_check
          %p636 = pneg %p116
        $region14: #{_lambda_.1} parent=11 // pred_check_branch
          %638 = sbr.rel (%p636) target = $region16
        $region15: #{_lambda_.1} parent=11 // pred_region
          _
        $region16: #{_lambda_.1} parent=11 // pred_fallthru
          _
        // Predicated region
        $region17: #{_lambda_.1} parent=11 // pred_check
          %p639 = pneg %p137
        $region18: #{_lambda_.1} parent=11 // pred_check_branch
          %641 = sbr.rel (%p639) target = $region20
        $region19: #{_lambda_.1} parent=11 // pred_region
          _
        $region20: #{_lambda_.1} parent=11 // pred_fallthru
          _
        // Predicated region
        $region21: #{_lambda_.1} parent=11 // pred_check
          %p642 = pneg %p158
        $region22: #{_lambda_.1} parent=11 // pred_check_branch
          %644 = sbr.rel (%p642) target = $region24
        $region23: #{_lambda_.1} parent=11 // pred_region
          _
        $region24: #{_lambda_.1} parent=11 // pred_fallthru
          _
        // Predicated region
        $region25: #{_lambda_.1} parent=11 // pred_check
          %p645 = pneg %p179
        $region26: #{_lambda_.1} parent=11 // pred_check_branch
          %647 = sbr.rel (%p645) target = $region28
        $region27: #{_lambda_.1} parent=11 // pred_region
          _
        $region28: #{_lambda_.1} parent=11 // pred_fallthru
          _
      $region12: #{_lambda_.1} parent=5 // pred_fallthru
        _
      %p648 = scmp.lt.s32.totalorder %s31, 4
      // Predicated region
      $region29: #{_lambda_.1} parent=5 // pred_check
        %p649 = pneg %p648
      $region30: #{_lambda_.1} parent=5 // pred_check_branch
        %651 = sbr.rel (%p649) target = $region32
      $region31: #{_lambda_.1} parent=5 // pred_region
        // Predicated region
        $region33: #{_lambda_.1} parent=31 // pred_check
          %p652 = pneg %p63
        $region34: #{_lambda_.1} parent=31 // pred_check_branch
          %654 = sbr.rel (%p652) target = $region36
        $region35: #{_lambda_.1} parent=31 // pred_region
          %p655 = scmp.lt.s32.totalorder %s38, 1
          %s656 = scalar_select %p655, %s38, 1
          %s657 = smul.addr %s656, 8
          %s658 = scalar_lea.vmem %s0, %s657
        $region36: #{_lambda_.1} parent=31 // pred_fallthru
          _
        // Predicated region
        $region37: #{_lambda_.1} parent=31 // pred_check
          %p659 = pneg %p89
        $region38: #{_lambda_.1} parent=31 // pred_check_branch
          %661 = sbr.rel (%p659) target = $region40
        $region39: #{_lambda_.1} parent=31 // pred_region
          %p662 = scmp.lt.s32.totalorder %s38, 1
          %s663 = scalar_select %p662, %s38, 1
          %s664 = scalar_lea.vmem %s1, %s663
        $region40: #{_lambda_.1} parent=31 // pred_fallthru
          _
        // Predicated region
        $region41: #{_lambda_.1} parent=31 // pred_check
          %p665 = pneg %p199
        $region42: #{_lambda_.1} parent=31 // pred_check_branch
          %667 = sbr.rel (%p665) target = $region44
        $region43: #{_lambda_.1} parent=31 // pred_region
          %p668 = scmp.lt.s32.totalorder %s39, 1
          %s669 = scalar_select %p668, %s39, 1
          %s670 = scalar_lea.vmem %s6, %s669
        $region44: #{_lambda_.1} parent=31 // pred_fallthru
          _
        // Predicated region
        $region45: #{_lambda_.1} parent=31 // pred_check
          %p671 = pneg %p225
        $region46: #{_lambda_.1} parent=31 // pred_check_branch
          %673 = sbr.rel (%p671) target = $region48
        $region47: #{_lambda_.1} parent=31 // pred_region
          %p674 = scmp.lt.s32.totalorder %s39, 1
          %s675 = scalar_select %p674, %s39, 1
          %s676 = scalar_lea.vmem %s7, %s675
        $region48: #{_lambda_.1} parent=31 // pred_fallthru
          _
        // Predicated region
        $region49: #{_lambda_.1} parent=31 // pred_check
          %p677 = pneg %p251
        $region50: #{_lambda_.1} parent=31 // pred_check_branch
          %679 = sbr.rel (%p677) target = $region52
        $region51: #{_lambda_.1} parent=31 // pred_region
          %p680 = scmp.lt.s32.totalorder %s39, 1
          %s681 = scalar_select %p680, %s39, 1
          %s682 = smul.addr %s681, 4
          %s683 = smul.addr %s682, 4
          %s684 = scalar_lea.vmem %s8, %s683
        $region52: #{_lambda_.1} parent=31 // pred_fallthru
          _
        // Predicated region
        $region53: #{_lambda_.1} parent=31 // pred_check
          %p685 = pneg %p277
        $region54: #{_lambda_.1} parent=31 // pred_check_branch
          %687 = sbr.rel (%p685) target = $region56
        $region55: #{_lambda_.1} parent=31 // pred_region
          %p688 = scmp.lt.s32.totalorder %s39, 1
          %s689 = scalar_select %p688, %s39, 1
          %s690 = scalar_lea.vmem %s9, %s689
        $region56: #{_lambda_.1} parent=31 // pred_fallthru
          _
        // Predicated region
        $region57: #{_lambda_.1} parent=31 // pred_check
          %p691 = pneg %p303
        $region58: #{_lambda_.1} parent=31 // pred_check_branch
          %693 = sbr.rel (%p691) target = $region60
        $region59: #{_lambda_.1} parent=31 // pred_region
          %p694 = scmp.lt.s32.totalorder %s39, 1
          %s695 = scalar_select %p694, %s39, 1
          %s696 = smul.addr %s695, 4
          %s697 = smul.addr %s696, 4
          %s698 = scalar_lea.vmem %s10, %s697
        $region60: #{_lambda_.1} parent=31 // pred_fallthru
          _
        // Predicated region
        $region61: #{_lambda_.1} parent=31 // pred_check
          %p699 = pneg %p329
        $region62: #{_lambda_.1} parent=31 // pred_check_branch
          %701 = sbr.rel (%p699) target = $region64
        $region63: #{_lambda_.1} parent=31 // pred_region
          %p702 = scmp.lt.s32.totalorder %s39, 1
          %s703 = scalar_select %p702, %s39, 1
          %s704 = scalar_lea.vmem %s11, %s703
        $region64: #{_lambda_.1} parent=31 // pred_fallthru
          _
        // Predicated region
        $region65: #{_lambda_.1} parent=31 // pred_check
          %p705 = pneg %p355
        $region66: #{_lambda_.1} parent=31 // pred_check_branch
          %707 = sbr.rel (%p705) target = $region68
        $region67: #{_lambda_.1} parent=31 // pred_region
          %p708 = scmp.lt.s32.totalorder %s39, 1
          %s709 = scalar_select %p708, %s39, 1
          %s710 = smul.addr %s709, 4
          %s711 = smul.addr %s710, 4
          %s712 = scalar_lea.vmem %s12, %s711
        $region68: #{_lambda_.1} parent=31 // pred_fallthru
          _
        // Predicated region
        $region69: #{_lambda_.1} parent=31 // pred_check
          %p713 = pneg %p381
        $region70: #{_lambda_.1} parent=31 // pred_check_branch
          %715 = sbr.rel (%p713) target = $region72
        $region71: #{_lambda_.1} parent=31 // pred_region
          %p716 = scmp.lt.s32.totalorder %s39, 1
          %s717 = scalar_select %p716, %s39, 1
          %s718 = scalar_lea.vmem %s13, %s717
        $region72: #{_lambda_.1} parent=31 // pred_fallthru
          _
        // Predicated region
        $region73: #{_lambda_.1} parent=31 // pred_check
          %p719 = pneg %p407
        $region74: #{_lambda_.1} parent=31 // pred_check_branch
          %721 = sbr.rel (%p719) target = $region76
        $region75: #{_lambda_.1} parent=31 // pred_region
          %p722 = scmp.lt.s32.totalorder %s39, 1
          %s723 = scalar_select %p722, %s39, 1
          %s724 = smul.addr %s723, 4
          %s725 = smul.addr %s724, 4
          %s726 = scalar_lea.vmem %s14, %s725
        $region76: #{_lambda_.1} parent=31 // pred_fallthru
          _
        // Predicated region
        $region77: #{_lambda_.1} parent=31 // pred_check
          %p727 = pneg %p433
        $region78: #{_lambda_.1} parent=31 // pred_check_branch
          %729 = sbr.rel (%p727) target = $region80
        $region79: #{_lambda_.1} parent=31 // pred_region
          %p730 = scmp.lt.s32.totalorder %s39, 1
          %s731 = scalar_select %p730, %s39, 1
          %s732 = scalar_lea.vmem %s15, %s731
        $region80: #{_lambda_.1} parent=31 // pred_fallthru
          _
        // Predicated region
        $region81: #{_lambda_.1} parent=31 // pred_check
          %p733 = pneg %p459
        $region82: #{_lambda_.1} parent=31 // pred_check_branch
          %735 = sbr.rel (%p733) target = $region84
        $region83: #{_lambda_.1} parent=31 // pred_region
          %p736 = scmp.lt.s32.totalorder %s39, 1
          %s737 = scalar_select %p736, %s39, 1
          %s738 = scalar_lea.vmem %s16, %s737
        $region84: #{_lambda_.1} parent=31 // pred_fallthru
          _
        // Predicated region
        $region85: #{_lambda_.1} parent=31 // pred_check
          %p739 = pneg %p485
        $region86: #{_lambda_.1} parent=31 // pred_check_branch
          %741 = sbr.rel (%p739) target = $region88
        $region87: #{_lambda_.1} parent=31 // pred_region
          %p742 = scmp.lt.s32.totalorder %s39, 1
          %s743 = scalar_select %p742, %s39, 1
          %s744 = scalar_lea.vmem %s17, %s743
        $region88: #{_lambda_.1} parent=31 // pred_fallthru
          _
        // Predicated region
        $region89: #{_lambda_.1} parent=31 // pred_check
          %p745 = pneg %p511
        $region90: #{_lambda_.1} parent=31 // pred_check_branch
          %747 = sbr.rel (%p745) target = $region92
        $region91: #{_lambda_.1} parent=31 // pred_region
          %p748 = scmp.lt.s32.totalorder %s39, 1
          %s749 = scalar_select %p748, %s39, 1
          %s750 = smul.addr %s749, 8
          %s751 = smul.addr %s750, 4
          %s752 = scalar_lea.vmem %s18, %s751
        $region92: #{_lambda_.1} parent=31 // pred_fallthru
          _
        // Predicated region
        $region93: #{_lambda_.1} parent=31 // pred_check
          %p753 = pneg %p537
        $region94: #{_lambda_.1} parent=31 // pred_check_branch
          %755 = sbr.rel (%p753) target = $region96
        $region95: #{_lambda_.1} parent=31 // pred_region
          %p756 = scmp.lt.s32.totalorder %s39, 1
          %s757 = scalar_select %p756, %s39, 1
          %s758 = scalar_lea.vmem %s19, %s757
        $region96: #{_lambda_.1} parent=31 // pred_fallthru
          _
        // Predicated region
        $region97: #{_lambda_.1} parent=31 // pred_check
          %p759 = pneg %p563
        $region98: #{_lambda_.1} parent=31 // pred_check_branch
          %761 = sbr.rel (%p759) target = $region100
        $region99: #{_lambda_.1} parent=31 // pred_region
          %p762 = scmp.lt.s32.totalorder %s39, 1
          %s763 = scalar_select %p762, %s39, 1
          %s764 = smul.addr %s763, 4
          %s765 = smul.addr %s764, 4
          %s766 = scalar_lea.vmem %s20, %s765
        $region100: #{_lambda_.1} parent=31 // pred_fallthru
          _
        // Predicated region
        $region101: #{_lambda_.1} parent=31 // pred_check
          %p767 = pneg %p589
        $region102: #{_lambda_.1} parent=31 // pred_check_branch
          %769 = sbr.rel (%p767) target = $region104
        $region103: #{_lambda_.1} parent=31 // pred_region
          %p770 = scmp.lt.s32.totalorder %s39, 1
          %s771 = scalar_select %p770, %s39, 1
          %s772 = scalar_lea.vmem %s21, %s771
        $region104: #{_lambda_.1} parent=31 // pred_fallthru
          _
      $region32: #{_lambda_.1} parent=5 // pred_fallthru
        _
      %p773 = scmp.le.s32.totalorder 1, %s31
      %p774 = scmp.lt.s32.totalorder %s31, 5
      %p775 = pnand %p773, %p774
      %p776 = pneg %p775
      // Predicated region
      $region105: #{_lambda_.1} parent=5 // pred_check
        _
      $region106: #{_lambda_.1} parent=5 // pred_check_branch
        %778 = sbr.rel (%p775) target = $region108
      $region107: #{_lambda_.1} parent=5 // pred_region
        %s779 = ssub.s32 %s31, 1
        %p780 = scmp.lt.s32.totalorder %s40, 1
        %s781 = scalar_select %p780, %s40, 1
        %s782 = smul.addr %s781, 8
        %s783 = scalar_lea.vmem %s0, %s782
        %p784 = pneg %p69
        %p785 = pneg %p66
        %p786 = scmp.lt.s32.totalorder %s40, 1
        %s787 = scalar_select %p786, %s40, 1
        %s788 = scalar_lea.vmem %s1, %s787
        %p789 = pneg %p95
        %p790 = pneg %p92
        %p791 = pneg %p116
        %p792 = pneg %p113
        %p793 = pneg %p137
        %p794 = pneg %p134
        %p795 = pneg %p158
        %p796 = pneg %p155
        %p797 = pneg %p179
        %p798 = pneg %p176
        %p799 = scmp.lt.s32.totalorder %s41, 1
        %s800 = scalar_select %p799, %s41, 1
        %s801 = scalar_lea.vmem %s6, %s800
        %p802 = pneg %p205
        %p803 = pneg %p202
        %p804 = scmp.lt.s32.totalorder %s41, 1
        %s805 = scalar_select %p804, %s41, 1
        %s806 = scalar_lea.vmem %s7, %s805
        %p807 = pneg %p231
        %p808 = pneg %p228
        %p809 = scmp.lt.s32.totalorder %s41, 1
        %s810 = scalar_select %p809, %s41, 1
        %s811 = smul.addr %s810, 4
        %s812 = smul.addr %s811, 4
        %s813 = scalar_lea.vmem %s8, %s812
        %p814 = pneg %p257
        %p815 = pneg %p254
        %p816 = scmp.lt.s32.totalorder %s41, 1
        %s817 = scalar_select %p816, %s41, 1
        %s818 = scalar_lea.vmem %s9, %s817
        %p819 = pneg %p283
        %p820 = pneg %p280
        %p821 = scmp.lt.s32.totalorder %s41, 1
        %s822 = scalar_select %p821, %s41, 1
        %s823 = smul.addr %s822, 4
        %s824 = smul.addr %s823, 4
        %s825 = scalar_lea.vmem %s10, %s824
        %p826 = pneg %p309
        %p827 = pneg %p306
        %p828 = scmp.lt.s32.totalorder %s41, 1
        %s829 = scalar_select %p828, %s41, 1
        %s830 = scalar_lea.vmem %s11, %s829
        %p831 = pneg %p335
        %p832 = pneg %p332
        %p833 = scmp.lt.s32.totalorder %s41, 1
        %s834 = scalar_select %p833, %s41, 1
        %s835 = smul.addr %s834, 4
        %s836 = smul.addr %s835, 4
        %s837 = scalar_lea.vmem %s12, %s836
        %p838 = pneg %p361
        %p839 = pneg %p358
        %p840 = scmp.lt.s32.totalorder %s41, 1
        %s841 = scalar_select %p840, %s41, 1
        %s842 = scalar_lea.vmem %s13, %s841
        %p843 = pneg %p387
        %p844 = pneg %p384
        %p845 = scmp.lt.s32.totalorder %s41, 1
        %s846 = scalar_select %p845, %s41, 1
        %s847 = smul.addr %s846, 4
        %s848 = smul.addr %s847, 4
        %s849 = scalar_lea.vmem %s14, %s848
        %p850 = pneg %p413
        %p851 = pneg %p410
        %p852 = scmp.lt.s32.totalorder %s41, 1
        %s853 = scalar_select %p852, %s41, 1
        %s854 = scalar_lea.vmem %s15, %s853
        %p855 = pneg %p439
        %p856 = pneg %p436
        %p857 = scmp.lt.s32.totalorder %s41, 1
        %s858 = scalar_select %p857, %s41, 1
        %s859 = scalar_lea.vmem %s16, %s858
        %p860 = pneg %p465
        %p861 = pneg %p462
        %p862 = scmp.lt.s32.totalorder %s41, 1
        %s863 = scalar_select %p862, %s41, 1
        %s864 = scalar_lea.vmem %s17, %s863
        %p865 = pneg %p491
        %p866 = pneg %p488
        %p867 = scmp.lt.s32.totalorder %s41, 1
        %s868 = scalar_select %p867, %s41, 1
        %s869 = smul.addr %s868, 8
        %s870 = smul.addr %s869, 4
        %s871 = scalar_lea.vmem %s18, %s870
        %p872 = pneg %p517
        %p873 = pneg %p514
        %p874 = scmp.lt.s32.totalorder %s41, 1
        %s875 = scalar_select %p874, %s41, 1
        %s876 = scalar_lea.vmem %s19, %s875
        %p877 = pneg %p543
        %p878 = pneg %p540
        %p879 = scmp.lt.s32.totalorder %s41, 1
        %s880 = scalar_select %p879, %s41, 1
        %s881 = smul.addr %s880, 4
        %s882 = smul.addr %s881, 4
        %s883 = scalar_lea.vmem %s20, %s882
        %p884 = pneg %p569
        %p885 = pneg %p566
        %p886 = scmp.lt.s32.totalorder %s41, 1
        %s887 = scalar_select %p886, %s41, 1
        %s888 = scalar_lea.vmem %s21, %s887
        %p889 = pneg %p595
        %p890 = pneg %p592
        %p891 = pneg %p621
        %p892 = pneg %p618
        %s893 = sand.u32 %s608, 1
        %s894 = scalar_lea.sflag [#allocation8], %s893
        %s895 = sand.u32 %s608, 1
        %s896 = smul.addr %s895, 8
        %s897 = scalar_lea.vmem [#allocation7], %s896
        %p898 = scmp.lt.s32.totalorder %s40, 1
        %s899 = scalar_select %p898, %s40, 1
        %s900 = smul.addr %s899, 8
        %s901 = scalar_lea.vmem %s0, %s900
        %p902 = scmp.lt.s32.totalorder %s40, 1
        %s903 = scalar_select %p902, %s40, 1
        %s904 = scalar_lea.vmem %s1, %s903
        %p905 = scmp.lt.s32.totalorder %s41, 1
        %s906 = scalar_select %p905, %s41, 1
        %s907 = scalar_lea.vmem %s6, %s906
        %p908 = scmp.lt.s32.totalorder %s41, 1
        %s909 = scalar_select %p908, %s41, 1
        %s910 = scalar_lea.vmem %s7, %s909
        %p911 = scmp.lt.s32.totalorder %s41, 1
        %s912 = scalar_select %p911, %s41, 1
        %s913 = smul.addr %s912, 4
        %s914 = smul.addr %s913, 4
        %s915 = scalar_lea.vmem %s8, %s914
        %p916 = scmp.lt.s32.totalorder %s41, 1
        %s917 = scalar_select %p916, %s41, 1
        %s918 = scalar_lea.vmem %s9, %s917
        %p919 = scmp.lt.s32.totalorder %s41, 1
        %s920 = scalar_select %p919, %s41, 1
        %s921 = smul.addr %s920, 4
        %s922 = smul.addr %s921, 4
        %s923 = scalar_lea.vmem %s10, %s922
        %p924 = scmp.lt.s32.totalorder %s41, 1
        %s925 = scalar_select %p924, %s41, 1
        %s926 = scalar_lea.vmem %s11, %s925
        %p927 = scmp.lt.s32.totalorder %s41, 1
        %s928 = scalar_select %p927, %s41, 1
        %s929 = smul.addr %s928, 4
        %s930 = smul.addr %s929, 4
        %s931 = scalar_lea.vmem %s12, %s930
        %p932 = scmp.lt.s32.totalorder %s41, 1
        %s933 = scalar_select %p932, %s41, 1
        %s934 = scalar_lea.vmem %s13, %s933
        %p935 = scmp.lt.s32.totalorder %s41, 1
        %s936 = scalar_select %p935, %s41, 1
        %s937 = smul.addr %s936, 4
        %s938 = smul.addr %s937, 4
        %s939 = scalar_lea.vmem %s14, %s938
        %p940 = scmp.lt.s32.totalorder %s41, 1
        %s941 = scalar_select %p940, %s41, 1
        %s942 = scalar_lea.vmem %s15, %s941
        %p943 = scmp.lt.s32.totalorder %s41, 1
        %s944 = scalar_select %p943, %s41, 1
        %s945 = scalar_lea.vmem %s16, %s944
        %p946 = scmp.lt.s32.totalorder %s41, 1
        %s947 = scalar_select %p946, %s41, 1
        %s948 = scalar_lea.vmem %s17, %s947
        %p949 = scmp.lt.s32.totalorder %s41, 1
        %s950 = scalar_select %p949, %s41, 1
        %s951 = smul.addr %s950, 8
        %s952 = smul.addr %s951, 4
        %s953 = scalar_lea.vmem %s18, %s952
        %p954 = scmp.lt.s32.totalorder %s41, 1
        %s955 = scalar_select %p954, %s41, 1
        %s956 = scalar_lea.vmem %s19, %s955
        %p957 = scmp.lt.s32.totalorder %s41, 1
        %s958 = scalar_select %p957, %s41, 1
        %s959 = smul.addr %s958, 4
        %s960 = smul.addr %s959, 4
        %s961 = scalar_lea.vmem %s20, %s960
        %p962 = scmp.lt.s32.totalorder %s41, 1
        %s963 = scalar_select %p962, %s41, 1
        %s964 = scalar_lea.vmem %s21, %s963
        %p966 = scmp.eq.s32.totalorder %s41, 0
        // Predicated region
        $region109: #{_lambda_.1} parent=107 // pred_check
          %p967 = pneg %p966
        $region110: #{_lambda_.1} parent=107 // pred_check_branch
          %969 = sbr.rel (%p967) target = $region112
        $region111: #{_lambda_.1} parent=107 // pred_region
          %v970 = vld [vmem:[%s901] sm:$0xff]
          %vm971 = vcmask 261120
          %v972 = vsel %vm971, %v970, 0.0
          %973 = vadd.xlane.f32.xlu0 %v972
          %v974 = vpop.xlane.xlu0 %973
          %v975 = vrcp.pop 32.0
          %v976 = vmul.f32 %v974, %v975
          %v977 = vsub.f32 %v970, %v976
          %v978 = vmul.f32 %v977, %v977
          %v979 = vsel %vm971, %v978, 0.0
          %980 = vadd.xlane.f32.xlu0 %v979
          %v981 = vpop.xlane.xlu0 %980
          %v982 = vmul.f32 %v981, %v975
          %v983 = vadd.f32 %v982, 1e-05
          %v984 = vrsqrt.pop %v983
          %v985 = vmul.f32 %v977, %v984
          %v986 = vld [vmem:[%s2] sm:$0x1]
          %v988 = vlaneseq
          %v989 = vshrl.u32 %v988, 7
          %v990 = vsub.s32 0, %v989
          %v991 = vrot.slane %v986, %v990
          %v993 = vmul.f32 %v985, %v991
          %v994 = vld [vmem:[%s3] sm:$0x1]
          %v996 = vlaneseq
          %v997 = vshrl.u32 %v996, 7
          %v998 = vsub.s32 0, %v997
          %v999 = vrot.slane %v994, %v998
          %v1001 = vadd.f32 %v993, %v999
          %1002 = vst.msk [vmem:[#allocation2] sm:$0xff] %vm971, %v1001
        $region112: #{_lambda_.1} parent=107 // pred_fallthru
          _
        %v1003 = vld [vmem:[#allocation2] sm:$0xff]
        %vm1004 = vcmask 261120
        %v1005 = vsel %vm1004, %v1003, 0.0
        %1006 = vadd.xlane.f32.xlu0 %v1005
        %v1007 = vpop.xlane.xlu0 %1006
        %v1008 = vrcp.pop 32.0
        %v1009 = vmul.f32 %v1007, %v1008
        %v1010 = vsub.f32 %v1003, %v1009
        %v1011 = vmul.f32 %v1010, %v1010
        %v1012 = vsel %vm1004, %v1011, 0.0
        %1013 = vadd.xlane.f32.xlu0 %v1012
        %v1014 = vpop.xlane.xlu0 %1013
        %v1015 = vmul.f32 %v1014, %v1008
        %v1016 = vadd.f32 %v1015, 1e-05
        %v1017 = vrsqrt.pop %v1016
        %v1018 = vmul.f32 %v1010, %v1017
        %v1019 = vld [vmem:[%s907] sm:$0x1]
        %v1021 = vlaneseq
        %v1022 = vshrl.u32 %v1021, 7
        %v1023 = vsub.s32 0, %v1022
        %v1024 = vrot.slane %v1019, %v1023
        %v1026 = vmul.f32 %v1018, %v1024
        %v1027 = vld [vmem:[%s910] sm:$0x1]
        %v1029 = vlaneseq
        %v1030 = vshrl.u32 %v1029, 7
        %v1031 = vsub.s32 0, %v1030
        %v1032 = vrot.slane %v1027, %v1031
        %v1034 = vadd.f32 %v1026, %v1032
        %v1035 = vpack.c.bf16 %v1034, %v1034
        %v1036 = vld [vmem:[%s915] sm:$0xf]
        %v1037 = vld [vmem:[%s915 + $0x4] sm:$0xf]
        %v1038 = vld [vmem:[%s915 + $0x8] sm:$0xf]
        %v1039 = vld [vmem:[%s915 + $0xc] sm:$0xf]
        %v1040 = vld [vmem:[%s918] sm:$0x1]
        %v1042 = vlaneseq
        %v1043 = vshrl.u32 %v1042, 7
        %v1044 = vsub.s32 0, %v1043
        %v1045 = vrot.slane %v1040, %v1044
        %v1051 = vunpack.c.l.b16 %v1036
        %v1052 = vunpack.c.l.b16 %v1037
        %v1053 = vunpack.c.l.b16 %v1038
        %v1054 = vunpack.c.l.b16 %v1039
        %v1055 = vpack.c.b16 %v1052, %v1051
        %v1056 = vpack.c.b16 %v1054, %v1053
        %v1058 = vsel %vm1004, %v1035, 0
        %v1061 = vsel %vm1004, %v1055, 0
        %v1064 = vsel %vm1004, %v1056, 0
        %1066 = vmatprep.subr.bf16.mxu0 0
        %1067 = vmatpush1.bf16.xpose.msra.mxu0 0
        %1068 = vmatprep.subr.bf16.mxu0 0
        %1069 = vmatpush1.bf16.xpose.msra.mxu0 0
        %1070 = vmatprep.subr.bf16.mxu0 0
        %1071 = vmatpush1.bf16.xpose.msra.mxu0 0
        %1072 = vmatprep.subr.bf16.mxu0 0
        %1073 = vmatpush1.bf16.xpose.msra.mxu0 0
        %1074 = vmatprep.subr.bf16.mxu0 0
        %1075 = vmatpush1.bf16.xpose.msra.mxu0 0
        %1076 = vmatprep.subr.bf16.mxu0 0
        %1077 = vmatpush1.bf16.xpose.msra.mxu0 0
        %1078 = vmatprep.subr.bf16.mxu0 0
        %1079 = vmatpush1.bf16.xpose.msra.mxu0 %v1064
        %1080 = vmatprep.subr.bf16.mxu0 0
        %1081 = vmatpush1.bf16.xpose.msra.mxu0 %v1061
        %1082 = vmatprep.subr.bf16.mxu0 0
        %1083 = vmatpush2.bf16.xpose.msra.mxu0 0
        %1084 = vmatprep.subr.bf16.mxu0 0
        %1085 = vmatpush2.bf16.xpose.msra.mxu0 0
        %1086 = vmatprep.subr.bf16.mxu0 0
        %1087 = vmatpush2.bf16.xpose.msra.mxu0 0
        %1088 = vmatprep.subr.bf16.mxu0 0
        %1089 = vmatpush2.bf16.xpose.msra.mxu0 0
        %1090 = vmatprep.subr.bf16.mxu0 0
        %1091 = vmatpush2.bf16.xpose.msra.mxu0 0
        %1092 = vmatprep.subr.bf16.mxu0 0
        %1093 = vmatpush2.bf16.xpose.msra.mxu0 0
        %1094 = vmatprep.subr.bf16.mxu0 0
        %1095 = vmatpush2.bf16.xpose.msra.mxu0 0
        %1096 = vmatprep.subr.bf16.mxu0 0
        %1097 = vmatpush2.bf16.xpose.msra.mxu0 0
        %1098 = vmatprep.mubr.bf16.mxu0 0
        %1099 = vmatmul.mubr.bf16.gmra.mxu0 %v1058
        %v1100 = vpop.f32.mrf.mxu0
        %v1101 = vadd.f32 %v1045, %v1100
        %v1102 = vpop.f32.mrf.mxu0
        %v1103 = vpop.f32.mrf.mxu0
        %v1104 = vpop.f32.mrf.mxu0
        %1105 = vdwg.mxu0
        %v1106 = vld [vmem:[%s923] sm:$0xf]
        %v1107 = vld [vmem:[%s923 + $0x4] sm:$0xf]
        %v1108 = vld [vmem:[%s923 + $0x8] sm:$0xf]
        %v1109 = vld [vmem:[%s923 + $0xc] sm:$0xf]
        %v1110 = vld [vmem:[%s926] sm:$0x1]
        %v1112 = vlaneseq
        %v1113 = vshrl.u32 %v1112, 7
        %v1114 = vsub.s32 0, %v1113
        %v1115 = vrot.slane %v1110, %v1114
        %v1121 = vunpack.c.l.b16 %v1106
        %v1122 = vunpack.c.l.b16 %v1107
        %v1123 = vunpack.c.l.b16 %v1108
        %v1124 = vunpack.c.l.b16 %v1109
        %v1125 = vpack.c.b16 %v1122, %v1121
        %v1126 = vpack.c.b16 %v1124, %v1123
        %v1128 = vsel %vm1004, %v1125, 0
        %v1131 = vsel %vm1004, %v1126, 0
        %1133 = vmatprep.subr.bf16.mxu0 0
        %1134 = vmatpush1.bf16.xpose.msra.mxu0 0
        %1135 = vmatprep.subr.bf16.mxu0 0
        %1136 = vmatpush1.bf16.xpose.msra.mxu0 0
        %1137 = vmatprep.subr.bf16.mxu0 0
        %1138 = vmatpush1.bf16.xpose.msra.mxu0 0
        %1139 = vmatprep.subr.bf16.mxu0 0
        %1140 = vmatpush1.bf16.xpose.msra.mxu0 0
        %1141 = vmatprep.subr.bf16.mxu0 0
        %1142 = vmatpush1.bf16.xpose.msra.mxu0 0
        %1143 = vmatprep.subr.bf16.mxu0 0
        %1144 = vmatpush1.bf16.xpose.msra.mxu0 0
        %1145 = vmatprep.subr.bf16.mxu0 0
        %1146 = vmatpush1.bf16.xpose.msra.mxu0 %v1131
        %1147 = vmatprep.subr.bf16.mxu0 0
        %1148 = vmatpush1.bf16.xpose.msra.mxu0 %v1128
        %1149 = vmatprep.subr.bf16.mxu0 0
        %1150 = vmatpush2.bf16.xpose.msra.mxu0 0
        %1151 = vmatprep.subr.bf16.mxu0 0
        %1152 = vmatpush2.bf16.xpose.msra.mxu0 0
        %1153 = vmatprep.subr.bf16.mxu0 0
        %1154 = vmatpush2.bf16.xpose.msra.mxu0 0
        %1155 = vmatprep.subr.bf16.mxu0 0
        %1156 = vmatpush2.bf16.xpose.msra.mxu0 0
        %1157 = vmatprep.subr.bf16.mxu0 0
        %1158 = vmatpush2.bf16.xpose.msra.mxu0 0
        %1159 = vmatprep.subr.bf16.mxu0 0
        %1160 = vmatpush2.bf16.xpose.msra.mxu0 0
        %1161 = vmatprep.subr.bf16.mxu0 0
        %1162 = vmatpush2.bf16.xpose.msra.mxu0 0
        %1163 = vmatprep.subr.bf16.mxu0 0
        %1164 = vmatpush2.bf16.xpose.msra.mxu0 0
        %1165 = vmatprep.mubr.bf16.mxu0 0
        %1166 = vmatmul.mubr.bf16.gmra.mxu0 %v1058
        %v1167 = vpop.f32.mrf.mxu0
        %v1168 = vadd.f32 %v1115, %v1167
        %v1169 = vpop.f32.mrf.mxu0
        %v1170 = vpop.f32.mrf.mxu0
        %v1171 = vpop.f32.mrf.mxu0
        %1172 = vdwg.mxu0
        %v1173 = vld [vmem:[%s931] sm:$0xf]
        %v1174 = vld [vmem:[%s931 + $0x4] sm:$0xf]
        %v1175 = vld [vmem:[%s931 + $0x8] sm:$0xf]
        %v1176 = vld [vmem:[%s931 + $0xc] sm:$0xf]
        %v1177 = vld [vmem:[%s934] sm:$0x1]
        %v1179 = vlaneseq
        %v1180 = vshrl.u32 %v1179, 7
        %v1181 = vsub.s32 0, %v1180
        %v1182 = vrot.slane %v1177, %v1181
        %v1188 = vunpack.c.l.b16 %v1173
        %v1189 = vunpack.c.l.b16 %v1174
        %v1190 = vunpack.c.l.b16 %v1175
        %v1191 = vunpack.c.l.b16 %v1176
        %v1192 = vpack.c.b16 %v1189, %v1188
        %v1193 = vpack.c.b16 %v1191, %v1190
        %v1195 = vsel %vm1004, %v1192, 0
        %v1198 = vsel %vm1004, %v1193, 0
        %1200 = vmatprep.subr.bf16.mxu0 0
        %1201 = vmatpush1.bf16.xpose.msra.mxu0 0
        %1202 = vmatprep.subr.bf16.mxu0 0
        %1203 = vmatpush1.bf16.xpose.msra.mxu0 0
        %1204 = vmatprep.subr.bf16.mxu0 0
        %1205 = vmatpush1.bf16.xpose.msra.mxu0 0
        %1206 = vmatprep.subr.bf16.mxu0 0
        %1207 = vmatpush1.bf16.xpose.msra.mxu0 0
        %1208 = vmatprep.subr.bf16.mxu0 0
        %1209 = vmatpush1.bf16.xpose.msra.mxu0 0
        %1210 = vmatprep.subr.bf16.mxu0 0
        %1211 = vmatpush1.bf16.xpose.msra.mxu0 0
        %1212 = vmatprep.subr.bf16.mxu0 0
        %1213 = vmatpush1.bf16.xpose.msra.mxu0 %v1198
        %1214 = vmatprep.subr.bf16.mxu0 0
        %1215 = vmatpush1.bf16.xpose.msra.mxu0 %v1195
        %1216 = vmatprep.subr.bf16.mxu0 0
        %1217 = vmatpush2.bf16.xpose.msra.mxu0 0
        %1218 = vmatprep.subr.bf16.mxu0 0
        %1219 = vmatpush2.bf16.xpose.msra.mxu0 0
        %1220 = vmatprep.subr.bf16.mxu0 0
        %1221 = vmatpush2.bf16.xpose.msra.mxu0 0
        %1222 = vmatprep.subr.bf16.mxu0 0
        %1223 = vmatpush2.bf16.xpose.msra.mxu0 0
        %1224 = vmatprep.subr.bf16.mxu0 0
        %1225 = vmatpush2.bf16.xpose.msra.mxu0 0
        %1226 = vmatprep.subr.bf16.mxu0 0
        %1227 = vmatpush2.bf16.xpose.msra.mxu0 0
        %1228 = vmatprep.subr.bf16.mxu0 0
        %1229 = vmatpush2.bf16.xpose.msra.mxu0 0
        %1230 = vmatprep.subr.bf16.mxu0 0
        %1231 = vmatpush2.bf16.xpose.msra.mxu0 0
        %1232 = vmatprep.mubr.bf16.mxu0 0
        %1233 = vmatmul.mubr.bf16.gmra.mxu0 %v1058
        %v1234 = vpop.f32.mrf.mxu0
        %v1235 = vadd.f32 %v1182, %v1234
        %v1236 = vpop.f32.mrf.mxu0
        %v1237 = vpop.f32.mrf.mxu0
        %v1238 = vpop.f32.mrf.mxu0
        %1239 = vdwg.mxu0
        %vm1240 = vcmask 64512
        %1241 = vst.msk [vmem:[#allocation3] sm:$0xff] %vm1240, %v1101
        %1242 = vst.msk [vmem:[#allocation4] sm:$0xff] %vm1240, %v1168
        %1243 = vst.msk [vmem:[#allocation5] sm:$0xff] %vm1240, %v1235
        %1245 = vrot.lane.b32.xlu0 %v1101, 120
        %v1246 = vpop.permute.xlu0 %1245
        %s1248 = scalar_lea.vmem [#allocation3], 8
        %1249 = vst.msk [vmem:[%s1248] sm:$0xff] %vm1240, %v1246
        %1251 = vrot.lane.b32.xlu0 %v1168, 120
        %v1252 = vpop.permute.xlu0 %1251
        %s1254 = scalar_lea.vmem [#allocation4], 8
        %1255 = vst.msk [vmem:[%s1254] sm:$0xff] %vm1240, %v1252
        %1257 = vrot.lane.b32.xlu0 %v1235, 120
        %v1258 = vpop.permute.xlu0 %1257
        %s1260 = scalar_lea.vmem [#allocation5], 8
        %1261 = vst.msk [vmem:[%s1260] sm:$0xff] %vm1240, %v1258
        %1262 = vrot.lane.b32.xlu0 %v1101, 112
        %v1263 = vpop.permute.xlu0 %1262
        %s1265 = scalar_lea.vmem [#allocation3], 16
        %1266 = vst.msk [vmem:[%s1265] sm:$0xff] %vm1240, %v1263
        %1267 = vrot.lane.b32.xlu0 %v1168, 112
        %v1268 = vpop.permute.xlu0 %1267
        %s1270 = scalar_lea.vmem [#allocation4], 16
        %1271 = vst.msk [vmem:[%s1270] sm:$0xff] %vm1240, %v1268
        %1272 = vrot.lane.b32.xlu0 %v1235, 112
        %v1273 = vpop.permute.xlu0 %1272
        %s1275 = scalar_lea.vmem [#allocation5], 16
        %1276 = vst.msk [vmem:[%s1275] sm:$0xff] %vm1240, %v1273
        %1277 = vrot.lane.b32.xlu0 %v1101, 104
        %v1278 = vpop.permute.xlu0 %1277
        %s1280 = scalar_lea.vmem [#allocation3], 24
        %1281 = vst.msk [vmem:[%s1280] sm:$0xff] %vm1240, %v1278
        %1282 = vrot.lane.b32.xlu0 %v1168, 104
        %v1283 = vpop.permute.xlu0 %1282
        %s1285 = scalar_lea.vmem [#allocation4], 24
        %1286 = vst.msk [vmem:[%s1285] sm:$0xff] %vm1240, %v1283
        %1287 = vrot.lane.b32.xlu0 %v1235, 104
        %v1288 = vpop.permute.xlu0 %1287
        %s1290 = scalar_lea.vmem [#allocation5], 24
        %1291 = vst.msk [vmem:[%s1290] sm:$0xff] %vm1240, %v1288
        %v1292 = vld [vmem:[#allocation3] sm:$0xff]
        %v1293 = vld [vmem:[#allocation3 + $0x8] sm:$0xff]
        %v1294 = vld [vmem:[#allocation3 + $0x10] sm:$0xff]
        %v1295 = vld [vmem:[#allocation3 + $0x18] sm:$0xff]
        %v1296 = vpack.c.bf16 %v1292, %v1292
        %v1297 = vpack.c.bf16 %v1293, %v1293
        %v1298 = vpack.c.bf16 %v1294, %v1294
        %v1299 = vpack.c.bf16 %v1295, %v1295
        %v1300 = vld [vmem:[#allocation4] sm:$0xff]
        %v1301 = vld [vmem:[#allocation4 + $0x8] sm:$0xff]
        %v1302 = vld [vmem:[#allocation4 + $0x10] sm:$0xff]
        %v1303 = vld [vmem:[#allocation4 + $0x18] sm:$0xff]
        %v1304 = vpack.c.bf16 %v1300, %v1300
        %v1305 = vpack.c.bf16 %v1301, %v1301
        %v1306 = vpack.c.bf16 %v1302, %v1302
        %v1307 = vpack.c.bf16 %v1303, %v1303
        %v1308 = vld [vmem:[#allocation5] sm:$0xff]
        %v1309 = vld [vmem:[#allocation5 + $0x8] sm:$0xff]
        %v1310 = vld [vmem:[#allocation5 + $0x10] sm:$0xff]
        %v1311 = vld [vmem:[#allocation5 + $0x18] sm:$0xff]
        %v1312 = vpack.c.bf16 %v1308, %v1308
        %v1313 = vpack.c.bf16 %v1309, %v1309
        %v1314 = vpack.c.bf16 %v1310, %v1310
        %v1315 = vpack.c.bf16 %v1311, %v1311
        %v1317 = vsel %vm1240, %v1296, 0
        %v1320 = vsel %vm1240, %v1304, 0
        %1322 = vmatprep.subr.bf16.mxu0 0
        %1323 = vmatpush1.bf16.xpose.msra.mxu0 0
        %1324 = vmatprep.subr.bf16.mxu0 0
        %1325 = vmatpush1.bf16.xpose.msra.mxu0 0
        %1326 = vmatprep.subr.bf16.mxu0 0
        %1327 = vmatpush1.bf16.xpose.msra.mxu0 0
        %1328 = vmatprep.subr.bf16.mxu0 0
        %1329 = vmatpush1.bf16.xpose.msra.mxu0 0
        %1330 = vmatprep.subr.bf16.mxu0 0
        %1331 = vmatpush1.bf16.xpose.msra.mxu0 0
        %1332 = vmatprep.subr.bf16.mxu0 0
        %1333 = vmatpush1.bf16.xpose.msra.mxu0 0
        %1334 = vmatprep.subr.bf16.mxu0 0
        %1335 = vmatpush1.bf16.xpose.msra.mxu0 0
        %1336 = vmatprep.subr.bf16.mxu0 0
        %1337 = vmatpush1.bf16.xpose.msra.mxu0 %v1320
        %1338 = vmatprep.subr.bf16.mxu0 0
        %1339 = vmatpush2.bf16.xpose.msra.mxu0 0
        %1340 = vmatprep.subr.bf16.mxu0 0
        %1341 = vmatpush2.bf16.xpose.msra.mxu0 0
        %1342 = vmatprep.subr.bf16.mxu0 0
        %1343 = vmatpush2.bf16.xpose.msra.mxu0 0
        %1344 = vmatprep.subr.bf16.mxu0 0
        %1345 = vmatpush2.bf16.xpose.msra.mxu0 0
        %1346 = vmatprep.subr.bf16.mxu0 0
        %1347 = vmatpush2.bf16.xpose.msra.mxu0 0
        %1348 = vmatprep.subr.bf16.mxu0 0
        %1349 = vmatpush2.bf16.xpose.msra.mxu0 0
        %1350 = vmatprep.subr.bf16.mxu0 0
        %1351 = vmatpush2.bf16.xpose.msra.mxu0 0
        %1352 = vmatprep.subr.bf16.mxu0 0
        %1353 = vmatpush2.bf16.xpose.msra.mxu0 0
        %1354 = vmatprep.mubr.bf16.mxu0 0
        %1355 = vmatmul.mubr.bf16.gmra.mxu0 %v1317
        %v1356 = vpop.f32.mrf.mxu0
        %v1357 = vadd.f32 0.0, %v1356
        %v1358 = vpop.f32.mrf.mxu0
        %v1359 = vpop.f32.mrf.mxu0
        %v1360 = vpop.f32.mrf.mxu0
        %1361 = vdwg.mxu0
        %v1363 = vsel %vm1240, %v1297, 0
        %v1366 = vsel %vm1240, %v1305, 0
        %1368 = vmatprep.subr.bf16.mxu0 0
        %1369 = vmatpush1.bf16.xpose.msra.mxu0 0
        %1370 = vmatprep.subr.bf16.mxu0 0
        %1371 = vmatpush1.bf16.xpose.msra.mxu0 0
        %1372 = vmatprep.subr.bf16.mxu0 0
        %1373 = vmatpush1.bf16.xpose.msra.mxu0 0
        %1374 = vmatprep.subr.bf16.mxu0 0
        %1375 = vmatpush1.bf16.xpose.msra.mxu0 0
        %1376 = vmatprep.subr.bf16.mxu0 0
        %1377 = vmatpush1.bf16.xpose.msra.mxu0 0
        %1378 = vmatprep.subr.bf16.mxu0 0
        %1379 = vmatpush1.bf16.xpose.msra.mxu0 0
        %1380 = vmatprep.subr.bf16.mxu0 0
        %1381 = vmatpush1.bf16.xpose.msra.mxu0 0
        %1382 = vmatprep.subr.bf16.mxu0 0
        %1383 = vmatpush1.bf16.xpose.msra.mxu0 %v1366
        %1384 = vmatprep.subr.bf16.mxu0 0
        %1385 = vmatpush2.bf16.xpose.msra.mxu0 0
        %1386 = vmatprep.subr.bf16.mxu0 0
        %1387 = vmatpush2.bf16.xpose.msra.mxu0 0
        %1388 = vmatprep.subr.bf16.mxu0 0
        %1389 = vmatpush2.bf16.xpose.msra.mxu0 0
        %1390 = vmatprep.subr.bf16.mxu0 0
        %1391 = vmatpush2.bf16.xpose.msra.mxu0 0
        %1392 = vmatprep.subr.bf16.mxu0 0
        %1393 = vmatpush2.bf16.xpose.msra.mxu0 0
        %1394 = vmatprep.subr.bf16.mxu0 0
        %1395 = vmatpush2.bf16.xpose.msra.mxu0 0
        %1396 = vmatprep.subr.bf16.mxu0 0
        %1397 = vmatpush2.bf16.xpose.msra.mxu0 0
        %1398 = vmatprep.subr.bf16.mxu0 0
        %1399 = vmatpush2.bf16.xpose.msra.mxu0 0
        %1400 = vmatprep.mubr.bf16.mxu0 0
        %1401 = vmatmul.mubr.bf16.gmra.mxu0 %v1363
        %v1402 = vpop.f32.mrf.mxu0
        %v1403 = vadd.f32 0.0, %v1402
        %v1404 = vpop.f32.mrf.mxu0
        %v1405 = vpop.f32.mrf.mxu0
        %v1406 = vpop.f32.mrf.mxu0
        %1407 = vdwg.mxu0
        %v1409 = vsel %vm1240, %v1298, 0
        %v1412 = vsel %vm1240, %v1306, 0
        %1414 = vmatprep.subr.bf16.mxu0 0
        %1415 = vmatpush1.bf16.xpose.msra.mxu0 0
        %1416 = vmatprep.subr.bf16.mxu0 0
        %1417 = vmatpush1.bf16.xpose.msra.mxu0 0
        %1418 = vmatprep.subr.bf16.mxu0 0
        %1419 = vmatpush1.bf16.xpose.msra.mxu0 0
        %1420 = vmatprep.subr.bf16.mxu0 0
        %1421 = vmatpush1.bf16.xpose.msra.mxu0 0
        %1422 = vmatprep.subr.bf16.mxu0 0
        %1423 = vmatpush1.bf16.xpose.msra.mxu0 0
        %1424 = vmatprep.subr.bf16.mxu0 0
        %1425 = vmatpush1.bf16.xpose.msra.mxu0 0
        %1426 = vmatprep.subr.bf16.mxu0 0
        %1427 = vmatpush1.bf16.xpose.msra.mxu0 0
        %1428 = vmatprep.subr.bf16.mxu0 0
        %1429 = vmatpush1.bf16.xpose.msra.mxu0 %v1412
        %1430 = vmatprep.subr.bf16.mxu0 0
        %1431 = vmatpush2.bf16.xpose.msra.mxu0 0
        %1432 = vmatprep.subr.bf16.mxu0 0
        %1433 = vmatpush2.bf16.xpose.msra.mxu0 0
        %1434 = vmatprep.subr.bf16.mxu0 0
        %1435 = vmatpush2.bf16.xpose.msra.mxu0 0
        %1436 = vmatprep.subr.bf16.mxu0 0
        %1437 = vmatpush2.bf16.xpose.msra.mxu0 0
        %1438 = vmatprep.subr.bf16.mxu0 0
        %1439 = vmatpush2.bf16.xpose.msra.mxu0 0
        %1440 = vmatprep.subr.bf16.mxu0 0
        %1441 = vmatpush2.bf16.xpose.msra.mxu0 0
        %1442 = vmatprep.subr.bf16.mxu0 0
        %1443 = vmatpush2.bf16.xpose.msra.mxu0 0
        %1444 = vmatprep.subr.bf16.mxu0 0
        %1445 = vmatpush2.bf16.xpose.msra.mxu0 0
        %1446 = vmatprep.mubr.bf16.mxu0 0
        %1447 = vmatmul.mubr.bf16.gmra.mxu0 %v1409
        %v1448 = vpop.f32.mrf.mxu0
        %v1449 = vadd.f32 0.0, %v1448
        %v1450 = vpop.f32.mrf.mxu0
        %v1451 = vpop.f32.mrf.mxu0
        %v1452 = vpop.f32.mrf.mxu0
        %1453 = vdwg.mxu0
        %v1455 = vsel %vm1240, %v1299, 0
        %v1458 = vsel %vm1240, %v1307, 0
        %1460 = vmatprep.subr.bf16.mxu0 0
        %1461 = vmatpush1.bf16.xpose.msra.mxu0 0
        %1462 = vmatprep.subr.bf16.mxu0 0
        %1463 = vmatpush1.bf16.xpose.msra.mxu0 0
        %1464 = vmatprep.subr.bf16.mxu0 0
        %1465 = vmatpush1.bf16.xpose.msra.mxu0 0
        %1466 = vmatprep.subr.bf16.mxu0 0
        %1467 = vmatpush1.bf16.xpose.msra.mxu0 0
        %1468 = vmatprep.subr.bf16.mxu0 0
        %1469 = vmatpush1.bf16.xpose.msra.mxu0 0
        %1470 = vmatprep.subr.bf16.mxu0 0
        %1471 = vmatpush1.bf16.xpose.msra.mxu0 0
        %1472 = vmatprep.subr.bf16.mxu0 0
        %1473 = vmatpush1.bf16.xpose.msra.mxu0 0
        %1474 = vmatprep.subr.bf16.mxu0 0
        %1475 = vmatpush1.bf16.xpose.msra.mxu0 %v1458
        %1476 = vmatprep.subr.bf16.mxu0 0
        %1477 = vmatpush2.bf16.xpose.msra.mxu0 0
        %1478 = vmatprep.subr.bf16.mxu0 0
        %1479 = vmatpush2.bf16.xpose.msra.mxu0 0
        %1480 = vmatprep.subr.bf16.mxu0 0
        %1481 = vmatpush2.bf16.xpose.msra.mxu0 0
        %1482 = vmatprep.subr.bf16.mxu0 0
        %1483 = vmatpush2.bf16.xpose.msra.mxu0 0
        %1484 = vmatprep.subr.bf16.mxu0 0
        %1485 = vmatpush2.bf16.xpose.msra.mxu0 0
        %1486 = vmatprep.subr.bf16.mxu0 0
        %1487 = vmatpush2.bf16.xpose.msra.mxu0 0
        %1488 = vmatprep.subr.bf16.mxu0 0
        %1489 = vmatpush2.bf16.xpose.msra.mxu0 0
        %1490 = vmatprep.subr.bf16.mxu0 0
        %1491 = vmatpush2.bf16.xpose.msra.mxu0 0
        %1492 = vmatprep.mubr.bf16.mxu0 0
        %1493 = vmatmul.mubr.bf16.gmra.mxu0 %v1455
        %v1494 = vpop.f32.mrf.mxu0
        %v1495 = vadd.f32 0.0, %v1494
        %v1496 = vpop.f32.mrf.mxu0
        %v1497 = vpop.f32.mrf.mxu0
        %v1498 = vpop.f32.mrf.mxu0
        %1499 = vdwg.mxu0
        %v1500 = vmul.f32 %v1357, 0.35355338
        %v1501 = vmul.f32 %v1403, 0.35355338
        %v1502 = vmul.f32 %v1449, 0.35355338
        %v1503 = vmul.f32 %v1495, 0.35355338
        %v1504 = vld [vmem:[%s904] sm:$0x1]
        %v1506 = vlaneseq
        %v1507 = vshrl.u32 %v1506, 7
        %v1508 = vsub.s32 0, %v1507
        %v1509 = vrot.slane %v1504, %v1508
        %v1511 = vadd.f32 %v1500, %v1509
        %v1512 = vadd.f32 %v1501, %v1509
        %v1513 = vadd.f32 %v1502, %v1509
        %v1514 = vadd.f32 %v1503, %v1509
        %v1515 = vsel %vm1240, %v1511, -inf
        %1516 = vmax.xlane.f32.xlu0 %v1515
        %v1517 = vpop.xlane.xlu0 %1516
        %v1518 = vsel %vm1240, %v1512, -inf
        %1519 = vmax.xlane.f32.xlu0 %v1518
        %v1520 = vpop.xlane.xlu0 %1519
        %v1521 = vsel %vm1240, %v1513, -inf
        %1522 = vmax.xlane.f32.xlu0 %v1521
        %v1523 = vpop.xlane.xlu0 %1522
        %v1524 = vsel %vm1240, %v1514, -inf
        %1525 = vmax.xlane.f32.xlu0 %v1524
        %v1526 = vpop.xlane.xlu0 %1525
        %v1527 = vsub.f32 %v1511, %v1517
        %v1528 = vsub.f32 %v1512, %v1520
        %v1529 = vsub.f32 %v1513, %v1523
        %v1530 = vsub.f32 %v1514, %v1526
        %v1531 = vmul.f32 %v1527, 1.442695
        %v1532 = vpow.pop %v1531
        %v1533 = vmul.f32 %v1528, 1.442695
        %v1534 = vpow.pop %v1533
        %v1535 = vmul.f32 %v1529, 1.442695
        %v1536 = vpow.pop %v1535
        %v1537 = vmul.f32 %v1530, 1.442695
        %v1538 = vpow.pop %v1537
        %v1539 = vsel %vm1240, %v1532, 0.0
        %1540 = vadd.xlane.f32.xlu0 %v1539
        %v1541 = vpop.xlane.xlu0 %1540
        %v1542 = vsel %vm1240, %v1534, 0.0
        %1543 = vadd.xlane.f32.xlu0 %v1542
        %v1544 = vpop.xlane.xlu0 %1543
        %v1545 = vsel %vm1240, %v1536, 0.0
        %1546 = vadd.xlane.f32.xlu0 %v1545
        %v1547 = vpop.xlane.xlu0 %1546
        %v1548 = vsel %vm1240, %v1538, 0.0
        %1549 = vadd.xlane.f32.xlu0 %v1548
        %v1550 = vpop.xlane.xlu0 %1549
        %v1551 = vrcp.pop %v1541
        %v1552 = vrcp.pop %v1544
        %v1553 = vrcp.pop %v1547
        %v1554 = vrcp.pop %v1550
        %v1555 = vmul.f32 %v1532, %v1551
        %v1556 = vmul.f32 %v1534, %v1552
        %v1557 = vmul.f32 %v1536, %v1553
        %v1558 = vmul.f32 %v1538, %v1554
        %v1559 = vpack.c.bf16 %v1555, %v1555
        %v1560 = vpack.c.bf16 %v1556, %v1556
        %v1561 = vpack.c.bf16 %v1557, %v1557
        %v1562 = vpack.c.bf16 %v1558, %v1558
        %v1564 = vsel %vm1240, %v1559, 0
        %vm1566 = vcmask 1043456
        %v1568 = vsel %vm1566, %v1312, 0
        %1570 = vmatprep.subr.bf16.mxu0 0
        %1571 = vmatpush1.bf16.msra.mxu0 0
        %1572 = vmatprep.subr.bf16.mxu0 0
        %1573 = vmatpush1.bf16.msra.mxu0 0
        %1574 = vmatprep.subr.bf16.mxu0 0
        %1575 = vmatpush1.bf16.msra.mxu0 0
        %1576 = vmatprep.subr.bf16.mxu0 0
        %1577 = vmatpush1.bf16.msra.mxu0 0
        %1578 = vmatprep.subr.bf16.mxu0 0
        %1579 = vmatpush1.bf16.msra.mxu0 0
        %1580 = vmatprep.subr.bf16.mxu0 0
        %1581 = vmatpush1.bf16.msra.mxu0 0
        %1582 = vmatprep.subr.bf16.mxu0 0
        %1583 = vmatpush1.bf16.msra.mxu0 0
        %1584 = vmatprep.subr.bf16.mxu0 0
        %1585 = vmatpush1.bf16.msra.mxu0 %v1568
        %1586 = vmatprep.subr.bf16.mxu0 0
        %1587 = vmatpush2.bf16.msra.mxu0 0
        %1588 = vmatprep.subr.bf16.mxu0 0
        %1589 = vmatpush2.bf16.msra.mxu0 0
        %1590 = vmatprep.subr.bf16.mxu0 0
        %1591 = vmatpush2.bf16.msra.mxu0 0
        %1592 = vmatprep.subr.bf16.mxu0 0
        %1593 = vmatpush2.bf16.msra.mxu0 0
        %1594 = vmatprep.subr.bf16.mxu0 0
        %1595 = vmatpush2.bf16.msra.mxu0 0
        %1596 = vmatprep.subr.bf16.mxu0 0
        %1597 = vmatpush2.bf16.msra.mxu0 0
        %1598 = vmatprep.subr.bf16.mxu0 0
        %1599 = vmatpush2.bf16.msra.mxu0 0
        %1600 = vmatprep.subr.bf16.mxu0 0
        %1601 = vmatpush2.bf16.msra.mxu0 0
        %1602 = vmatprep.mubr.bf16.mxu0 0
        %1603 = vmatmul.mubr.bf16.gmra.mxu0 %v1564
        %v1604 = vpop.f32.mrf.mxu0
        %v1605 = vadd.f32 0.0, %v1604
        %v1606 = vpop.f32.mrf.mxu0
        %v1607 = vpop.f32.mrf.mxu0
        %v1608 = vpop.f32.mrf.mxu0
        %1609 = vdwg.mxu0
        %v1611 = vsel %vm1240, %v1560, 0
        %v1614 = vsel %vm1566, %v1313, 0
        %1616 = vmatprep.subr.bf16.mxu0 0
        %1617 = vmatpush1.bf16.msra.mxu0 0
        %1618 = vmatprep.subr.bf16.mxu0 0
        %1619 = vmatpush1.bf16.msra.mxu0 0
        %1620 = vmatprep.subr.bf16.mxu0 0
        %1621 = vmatpush1.bf16.msra.mxu0 0
        %1622 = vmatprep.subr.bf16.mxu0 0
        %1623 = vmatpush1.bf16.msra.mxu0 0
        %1624 = vmatprep.subr.bf16.mxu0 0
        %1625 = vmatpush1.bf16.msra.mxu0 0
        %1626 = vmatprep.subr.bf16.mxu0 0
        %1627 = vmatpush1.bf16.msra.mxu0 0
        %1628 = vmatprep.subr.bf16.mxu0 0
        %1629 = vmatpush1.bf16.msra.mxu0 0
        %1630 = vmatprep.subr.bf16.mxu0 0
        %1631 = vmatpush1.bf16.msra.mxu0 %v1614
        %1632 = vmatprep.subr.bf16.mxu0 0
        %1633 = vmatpush2.bf16.msra.mxu0 0
        %1634 = vmatprep.subr.bf16.mxu0 0
        %1635 = vmatpush2.bf16.msra.mxu0 0
        %1636 = vmatprep.subr.bf16.mxu0 0
        %1637 = vmatpush2.bf16.msra.mxu0 0
        %1638 = vmatprep.subr.bf16.mxu0 0
        %1639 = vmatpush2.bf16.msra.mxu0 0
        %1640 = vmatprep.subr.bf16.mxu0 0
        %1641 = vmatpush2.bf16.msra.mxu0 0
        %1642 = vmatprep.subr.bf16.mxu0 0
        %1643 = vmatpush2.bf16.msra.mxu0 0
        %1644 = vmatprep.subr.bf16.mxu0 0
        %1645 = vmatpush2.bf16.msra.mxu0 0
        %1646 = vmatprep.subr.bf16.mxu0 0
        %1647 = vmatpush2.bf16.msra.mxu0 0
        %1648 = vmatprep.mubr.bf16.mxu0 0
        %1649 = vmatmul.mubr.bf16.gmra.mxu0 %v1611
        %v1650 = vpop.f32.mrf.mxu0
        %v1651 = vadd.f32 0.0, %v1650
        %v1652 = vpop.f32.mrf.mxu0
        %v1653 = vpop.f32.mrf.mxu0
        %v1654 = vpop.f32.mrf.mxu0
        %1655 = vdwg.mxu0
        %v1657 = vsel %vm1240, %v1561, 0
        %v1660 = vsel %vm1566, %v1314, 0
        %1662 = vmatprep.subr.bf16.mxu0 0
        %1663 = vmatpush1.bf16.msra.mxu0 0
        %1664 = vmatprep.subr.bf16.mxu0 0
        %1665 = vmatpush1.bf16.msra.mxu0 0
        %1666 = vmatprep.subr.bf16.mxu0 0
        %1667 = vmatpush1.bf16.msra.mxu0 0
        %1668 = vmatprep.subr.bf16.mxu0 0
        %1669 = vmatpush1.bf16.msra.mxu0 0
        %1670 = vmatprep.subr.bf16.mxu0 0
        %1671 = vmatpush1.bf16.msra.mxu0 0
        %1672 = vmatprep.subr.bf16.mxu0 0
        %1673 = vmatpush1.bf16.msra.mxu0 0
        %1674 = vmatprep.subr.bf16.mxu0 0
        %1675 = vmatpush1.bf16.msra.mxu0 0
        %1676 = vmatprep.subr.bf16.mxu0 0
        %1677 = vmatpush1.bf16.msra.mxu0 %v1660
        %1678 = vmatprep.subr.bf16.mxu0 0
        %1679 = vmatpush2.bf16.msra.mxu0 0
        %1680 = vmatprep.subr.bf16.mxu0 0
        %1681 = vmatpush2.bf16.msra.mxu0 0
        %1682 = vmatprep.subr.bf16.mxu0 0
        %1683 = vmatpush2.bf16.msra.mxu0 0
        %1684 = vmatprep.subr.bf16.mxu0 0
        %1685 = vmatpush2.bf16.msra.mxu0 0
        %1686 = vmatprep.subr.bf16.mxu0 0
        %1687 = vmatpush2.bf16.msra.mxu0 0
        %1688 = vmatprep.subr.bf16.mxu0 0
        %1689 = vmatpush2.bf16.msra.mxu0 0
        %1690 = vmatprep.subr.bf16.mxu0 0
        %1691 = vmatpush2.bf16.msra.mxu0 0
        %1692 = vmatprep.subr.bf16.mxu0 0
        %1693 = vmatpush2.bf16.msra.mxu0 0
        %1694 = vmatprep.mubr.bf16.mxu0 0
        %1695 = vmatmul.mubr.bf16.gmra.mxu0 %v1657
        %v1696 = vpop.f32.mrf.mxu0
        %v1697 = vadd.f32 0.0, %v1696
        %v1698 = vpop.f32.mrf.mxu0
        %v1699 = vpop.f32.mrf.mxu0
        %v1700 = vpop.f32.mrf.mxu0
        %1701 = vdwg.mxu0
        %v1703 = vsel %vm1240, %v1562, 0
        %v1706 = vsel %vm1566, %v1315, 0
        %1708 = vmatprep.subr.bf16.mxu0 0
        %1709 = vmatpush1.bf16.msra.mxu0 0
        %1710 = vmatprep.subr.bf16.mxu0 0
        %1711 = vmatpush1.bf16.msra.mxu0 0
        %1712 = vmatprep.subr.bf16.mxu0 0
        %1713 = vmatpush1.bf16.msra.mxu0 0
        %1714 = vmatprep.subr.bf16.mxu0 0
        %1715 = vmatpush1.bf16.msra.mxu0 0
        %1716 = vmatprep.subr.bf16.mxu0 0
        %1717 = vmatpush1.bf16.msra.mxu0 0
        %1718 = vmatprep.subr.bf16.mxu0 0
        %1719 = vmatpush1.bf16.msra.mxu0 0
        %1720 = vmatprep.subr.bf16.mxu0 0
        %1721 = vmatpush1.bf16.msra.mxu0 0
        %1722 = vmatprep.subr.bf16.mxu0 0
        %1723 = vmatpush1.bf16.msra.mxu0 %v1706
        %1724 = vmatprep.subr.bf16.mxu0 0
        %1725 = vmatpush2.bf16.msra.mxu0 0
        %1726 = vmatprep.subr.bf16.mxu0 0
        %1727 = vmatpush2.bf16.msra.mxu0 0
        %1728 = vmatprep.subr.bf16.mxu0 0
        %1729 = vmatpush2.bf16.msra.mxu0 0
        %1730 = vmatprep.subr.bf16.mxu0 0
        %1731 = vmatpush2.bf16.msra.mxu0 0
        %1732 = vmatprep.subr.bf16.mxu0 0
        %1733 = vmatpush2.bf16.msra.mxu0 0
        %1734 = vmatprep.subr.bf16.mxu0 0
        %1735 = vmatpush2.bf16.msra.mxu0 0
        %1736 = vmatprep.subr.bf16.mxu0 0
        %1737 = vmatpush2.bf16.msra.mxu0 0
        %1738 = vmatprep.subr.bf16.mxu0 0
        %1739 = vmatpush2.bf16.msra.mxu0 0
        %1740 = vmatprep.mubr.bf16.mxu0 0
        %1741 = vmatmul.mubr.bf16.gmra.mxu0 %v1703
        %v1742 = vpop.f32.mrf.mxu0
        %v1743 = vadd.f32 0.0, %v1742
        %v1744 = vpop.f32.mrf.mxu0
        %v1745 = vpop.f32.mrf.mxu0
        %v1746 = vpop.f32.mrf.mxu0
        %1747 = vdwg.mxu0
        %1748 = vst.msk [vmem:[#allocation6] sm:$0xff] %vm1240, %v1605
        %1750 = vrot.lane.b32.xlu0 %v1651, 8
        %v1751 = vpop.permute.xlu0 %1750
        %vm1753 = vcmask 130112
        %1754 = vst.msk [vmem:[#allocation6] sm:$0xff] %vm1753, %v1751
        %1756 = vrot.lane.b32.xlu0 %v1697, 16
        %v1757 = vpop.permute.xlu0 %1756
        %vm1759 = vcmask 195712
        %1760 = vst.msk [vmem:[#allocation6] sm:$0xff] %vm1759, %v1757
        %1762 = vrot.lane.b32.xlu0 %v1743, 24
        %v1763 = vpop.permute.xlu0 %1762
        %vm1765 = vcmask 261312
        %1766 = vst.msk [vmem:[#allocation6] sm:$0xff] %vm1765, %v1763
        %v1767 = vld [vmem:[#allocation6] sm:$0xff]
        %v1768 = vpack.c.bf16 %v1767, %v1767
        %v1769 = vld [vmem:[%s939] sm:$0xf]
        %v1770 = vld [vmem:[%s939 + $0x4] sm:$0xf]
        %v1771 = vld [vmem:[%s939 + $0x8] sm:$0xf]
        %v1772 = vld [vmem:[%s939 + $0xc] sm:$0xf]
        %v1773 = vld [vmem:[%s942] sm:$0x1]
        %v1775 = vlaneseq
        %v1776 = vshrl.u32 %v1775, 7
        %v1777 = vsub.s32 0, %v1776
        %v1778 = vrot.slane %v1773, %v1777
        %v1784 = vunpack.c.l.b16 %v1769
        %v1785 = vunpack.c.l.b16 %v1770
        %v1786 = vunpack.c.l.b16 %v1771
        %v1787 = vunpack.c.l.b16 %v1772
        %v1788 = vpack.c.b16 %v1785, %v1784
        %v1789 = vpack.c.b16 %v1787, %v1786
        %v1791 = vsel %vm1004, %v1768, 0
        %v1794 = vsel %vm1004, %v1788, 0
        %v1797 = vsel %vm1004, %v1789, 0
        %1799 = vmatprep.subr.bf16.mxu0 0
        %1800 = vmatpush1.bf16.xpose.msra.mxu0 0
        %1801 = vmatprep.subr.bf16.mxu0 0
        %1802 = vmatpush1.bf16.xpose.msra.mxu0 0
        %1803 = vmatprep.subr.bf16.mxu0 0
        %1804 = vmatpush1.bf16.xpose.msra.mxu0 0
        %1805 = vmatprep.subr.bf16.mxu0 0
        %1806 = vmatpush1.bf16.xpose.msra.mxu0 0
        %1807 = vmatprep.subr.bf16.mxu0 0
        %1808 = vmatpush1.bf16.xpose.msra.mxu0 0
        %1809 = vmatprep.subr.bf16.mxu0 0
        %1810 = vmatpush1.bf16.xpose.msra.mxu0 0
        %1811 = vmatprep.subr.bf16.mxu0 0
        %1812 = vmatpush1.bf16.xpose.msra.mxu0 %v1797
        %1813 = vmatprep.subr.bf16.mxu0 0
        %1814 = vmatpush1.bf16.xpose.msra.mxu0 %v1794
        %1815 = vmatprep.subr.bf16.mxu0 0
        %1816 = vmatpush2.bf16.xpose.msra.mxu0 0
        %1817 = vmatprep.subr.bf16.mxu0 0
        %1818 = vmatpush2.bf16.xpose.msra.mxu0 0
        %1819 = vmatprep.subr.bf16.mxu0 0
        %1820 = vmatpush2.bf16.xpose.msra.mxu0 0
        %1821 = vmatprep.subr.bf16.mxu0 0
        %1822 = vmatpush2.bf16.xpose.msra.mxu0 0
        %1823 = vmatprep.subr.bf16.mxu0 0
        %1824 = vmatpush2.bf16.xpose.msra.mxu0 0
        %1825 = vmatprep.subr.bf16.mxu0 0
        %1826 = vmatpush2.bf16.xpose.msra.mxu0 0
        %1827 = vmatprep.subr.bf16.mxu0 0
        %1828 = vmatpush2.bf16.xpose.msra.mxu0 0
        %1829 = vmatprep.subr.bf16.mxu0 0
        %1830 = vmatpush2.bf16.xpose.msra.mxu0 0
        %1831 = vmatprep.mubr.bf16.mxu0 0
        %1832 = vmatmul.mubr.bf16.gmra.mxu0 %v1791
        %v1833 = vpop.f32.mrf.mxu0
        %v1834 = vadd.f32 %v1778, %v1833
        %v1835 = vpop.f32.mrf.mxu0
        %v1836 = vpop.f32.mrf.mxu0
        %v1837 = vpop.f32.mrf.mxu0
        %1838 = vdwg.mxu0
        %v1839 = vadd.f32 %v1003, %v1834
        %v1840 = vsel %vm1004, %v1839, 0.0
        %1841 = vadd.xlane.f32.xlu0 %v1840
        %v1842 = vpop.xlane.xlu0 %1841
        %v1843 = vmul.f32 %v1842, %v1008
        %v1844 = vsub.f32 %v1839, %v1843
        %v1845 = vmul.f32 %v1844, %v1844
        %v1846 = vsel %vm1004, %v1845, 0.0
        %1847 = vadd.xlane.f32.xlu0 %v1846
        %v1848 = vpop.xlane.xlu0 %1847
        %v1849 = vmul.f32 %v1848, %v1008
        %v1850 = vadd.f32 %v1849, 1e-05
        %v1851 = vrsqrt.pop %v1850
        %v1852 = vmul.f32 %v1844, %v1851
        %v1853 = vld [vmem:[%s945] sm:$0x1]
        %v1855 = vlaneseq
        %v1856 = vshrl.u32 %v1855, 7
        %v1857 = vsub.s32 0, %v1856
        %v1858 = vrot.slane %v1853, %v1857
        %v1860 = vmul.f32 %v1852, %v1858
        %v1861 = vld [vmem:[%s948] sm:$0x1]
        %v1863 = vlaneseq
        %v1864 = vshrl.u32 %v1863, 7
        %v1865 = vsub.s32 0, %v1864
        %v1866 = vrot.slane %v1861, %v1865
        %v1868 = vadd.f32 %v1860, %v1866
        %v1869 = vpack.c.bf16 %v1868, %v1868
        %v1870 = vld [vmem:[%s953] sm:$0xf]
        %v1871 = vld [vmem:[%s953 + $0x4] sm:$0xf]
        %v1872 = vld [vmem:[%s953 + $0x8] sm:$0xf]
        %v1873 = vld [vmem:[%s953 + $0xc] sm:$0xf]
        %v1874 = vld [vmem:[%s953 + $0x10] sm:$0xf]
        %v1875 = vld [vmem:[%s953 + $0x14] sm:$0xf]
        %v1876 = vld [vmem:[%s953 + $0x18] sm:$0xf]
        %v1877 = vld [vmem:[%s953 + $0x1c] sm:$0xf]
        %v1878 = vld [vmem:[%s956] sm:$0x1]
        %v1880 = vlaneseq
        %v1881 = vshrl.u32 %v1880, 7
        %v1882 = vsub.s32 0, %v1881
        %v1883 = vrot.slane %v1878, %v1882
        %v1893 = vunpack.c.l.b16 %v1870
        %v1894 = vunpack.c.l.b16 %v1871
        %v1895 = vunpack.c.l.b16 %v1872
        %v1896 = vunpack.c.l.b16 %v1873
        %v1897 = vunpack.c.l.b16 %v1874
        %v1898 = vunpack.c.l.b16 %v1875
        %v1899 = vunpack.c.l.b16 %v1876
        %v1900 = vunpack.c.l.b16 %v1877
        %v1901 = vpack.c.b16 %v1894, %v1893
        %v1902 = vpack.c.b16 %v1896, %v1895
        %v1903 = vpack.c.b16 %v1898, %v1897
        %v1904 = vpack.c.b16 %v1900, %v1899
        %v1906 = vsel %vm1004, %v1869, 0
        %v1909 = vsel %vm1004, %v1901, 0
        %v1912 = vsel %vm1004, %v1902, 0
        %v1915 = vsel %vm1004, %v1903, 0
        %v1918 = vsel %vm1004, %v1904, 0
        %1920 = vmatprep.subr.bf16.mxu0 0
        %1921 = vmatpush1.bf16.xpose.msra.mxu0 0
        %1922 = vmatprep.subr.bf16.mxu0 0
        %1923 = vmatpush1.bf16.xpose.msra.mxu0 0
        %1924 = vmatprep.subr.bf16.mxu0 0
        %1925 = vmatpush1.bf16.xpose.msra.mxu0 0
        %1926 = vmatprep.subr.bf16.mxu0 0
        %1927 = vmatpush1.bf16.xpose.msra.mxu0 0
        %1928 = vmatprep.subr.bf16.mxu0 0
        %1929 = vmatpush1.bf16.xpose.msra.mxu0 %v1918
        %1930 = vmatprep.subr.bf16.mxu0 0
        %1931 = vmatpush1.bf16.xpose.msra.mxu0 %v1915
        %1932 = vmatprep.subr.bf16.mxu0 0
        %1933 = vmatpush1.bf16.xpose.msra.mxu0 %v1912
        %1934 = vmatprep.subr.bf16.mxu0 0
        %1935 = vmatpush1.bf16.xpose.msra.mxu0 %v1909
        %1936 = vmatprep.subr.bf16.mxu0 0
        %1937 = vmatpush2.bf16.xpose.msra.mxu0 0
        %1938 = vmatprep.subr.bf16.mxu0 0
        %1939 = vmatpush2.bf16.xpose.msra.mxu0 0
        %1940 = vmatprep.subr.bf16.mxu0 0
        %1941 = vmatpush2.bf16.xpose.msra.mxu0 0
        %1942 = vmatprep.subr.bf16.mxu0 0
        %1943 = vmatpush2.bf16.xpose.msra.mxu0 0
        %1944 = vmatprep.subr.bf16.mxu0 0
        %1945 = vmatpush2.bf16.xpose.msra.mxu0 0
        %1946 = vmatprep.subr.bf16.mxu0 0
        %1947 = vmatpush2.bf16.xpose.msra.mxu0 0
        %1948 = vmatprep.subr.bf16.mxu0 0
        %1949 = vmatpush2.bf16.xpose.msra.mxu0 0
        %1950 = vmatprep.subr.bf16.mxu0 0
        %1951 = vmatpush2.bf16.xpose.msra.mxu0 0
        %1952 = vmatprep.mubr.bf16.mxu0 0
        %1953 = vmatmul.mubr.bf16.gmra.mxu0 %v1906
        %v1954 = vpop.f32.mrf.mxu0
        %v1955 = vadd.f32 %v1883, %v1954
        %v1956 = vpop.f32.mrf.mxu0
        %v1957 = vpop.f32.mrf.mxu0
        %v1958 = vpop.f32.mrf.mxu0
        %1959 = vdwg.mxu0
        %v1960 = vmul.f32 %v1955, %v1955
        %v1961 = vmul.f32 %v1955, %v1960
        %v1962 = vmul.f32 %v1961, 0.044715
        %v1963 = vadd.f32 %v1955, %v1962
        %v1964 = vmul.f32 %v1963, 0.7978846
        %v1965 = vtanh.pop %v1964
        %v1966 = vadd.f32 %v1965, 1.0
        %v1967 = vmul.f32 %v1966, 0.5
        %v1968 = vmul.f32 %v1955, %v1967
        %v1969 = vpack.c.bf16 %v1968, %v1968
        %v1970 = vld [vmem:[%s961] sm:$0xf]
        %v1971 = vld [vmem:[%s961 + $0x4] sm:$0xf]
        %v1972 = vld [vmem:[%s961 + $0x8] sm:$0xf]
        %v1973 = vld [vmem:[%s961 + $0xc] sm:$0xf]
        %v1974 = vld [vmem:[%s964] sm:$0x1]
        %v1976 = vlaneseq
        %v1977 = vshrl.u32 %v1976, 7
        %v1978 = vsub.s32 0, %v1977
        %v1979 = vrot.slane %v1974, %v1978
        %v1985 = vunpack.c.l.b16 %v1970
        %v1986 = vunpack.c.l.b16 %v1971
        %v1987 = vunpack.c.l.b16 %v1972
        %v1988 = vunpack.c.l.b16 %v1973
        %v1989 = vpack.c.b16 %v1986, %v1985
        %v1990 = vpack.c.b16 %v1988, %v1987
        %vm1991 = vcmask 523264
        %v1993 = vsel %vm1991, %v1969, 0
        %v1996 = vsel %vm1991, %v1989, 0
        %v1999 = vsel %vm1991, %v1990, 0
        %2001 = vmatprep.subr.bf16.mxu0 0
        %2002 = vmatpush1.bf16.xpose.msra.mxu0 0
        %2003 = vmatprep.subr.bf16.mxu0 0
        %2004 = vmatpush1.bf16.xpose.msra.mxu0 0
        %2005 = vmatprep.subr.bf16.mxu0 0
        %2006 = vmatpush1.bf16.xpose.msra.mxu0 0
        %2007 = vmatprep.subr.bf16.mxu0 0
        %2008 = vmatpush1.bf16.xpose.msra.mxu0 0
        %2009 = vmatprep.subr.bf16.mxu0 0
        %2010 = vmatpush1.bf16.xpose.msra.mxu0 0
        %2011 = vmatprep.subr.bf16.mxu0 0
        %2012 = vmatpush1.bf16.xpose.msra.mxu0 0
        %2013 = vmatprep.subr.bf16.mxu0 0
        %2014 = vmatpush1.bf16.xpose.msra.mxu0 %v1999
        %2015 = vmatprep.subr.bf16.mxu0 0
        %2016 = vmatpush1.bf16.xpose.msra.mxu0 %v1996
        %2017 = vmatprep.subr.bf16.mxu0 0
        %2018 = vmatpush2.bf16.xpose.msra.mxu0 0
        %2019 = vmatprep.subr.bf16.mxu0 0
        %2020 = vmatpush2.bf16.xpose.msra.mxu0 0
        %2021 = vmatprep.subr.bf16.mxu0 0
        %2022 = vmatpush2.bf16.xpose.msra.mxu0 0
        %2023 = vmatprep.subr.bf16.mxu0 0
        %2024 = vmatpush2.bf16.xpose.msra.mxu0 0
        %2025 = vmatprep.subr.bf16.mxu0 0
        %2026 = vmatpush2.bf16.xpose.msra.mxu0 0
        %2027 = vmatprep.subr.bf16.mxu0 0
        %2028 = vmatpush2.bf16.xpose.msra.mxu0 0
        %2029 = vmatprep.subr.bf16.mxu0 0
        %2030 = vmatpush2.bf16.xpose.msra.mxu0 0
        %2031 = vmatprep.subr.bf16.mxu0 0
        %2032 = vmatpush2.bf16.xpose.msra.mxu0 0
        %2033 = vmatprep.mubr.bf16.mxu0 0
        %2034 = vmatmul.mubr.bf16.gmra.mxu0 %v1993
        %v2035 = vpop.f32.mrf.mxu0
        %v2036 = vadd.f32 %v1979, %v2035
        %v2037 = vpop.f32.mrf.mxu0
        %v2038 = vpop.f32.mrf.mxu0
        %v2039 = vpop.f32.mrf.mxu0
        %2040 = vdwg.mxu0
        %v2041 = vadd.f32 %v1839, %v2036
        %2042 = vst.msk [vmem:[#allocation2] sm:$0xff] %vm1004, %v2041
        %p2043 = scmp.eq.s32.totalorder %s41, 1
        // Predicated region
        $region113: #{_lambda_.1} parent=107 // pred_check
          %p2044 = pneg %p2043
        $region114: #{_lambda_.1} parent=107 // pred_check_branch
          %2046 = sbr.rel (%p2044) target = $region116
        $region115: #{_lambda_.1} parent=107 // pred_region
          %v2047 = vsel %vm1004, %v2041, 0.0
          %2048 = vadd.xlane.f32.xlu0 %v2047
          %v2049 = vpop.xlane.xlu0 %2048
          %v2050 = vmul.f32 %v2049, %v1008
          %v2051 = vsub.f32 %v2041, %v2050
          %v2052 = vmul.f32 %v2051, %v2051
          %v2053 = vsel %vm1004, %v2052, 0.0
          %2054 = vadd.xlane.f32.xlu0 %v2053
          %v2055 = vpop.xlane.xlu0 %2054
          %v2056 = vmul.f32 %v2055, %v1008
          %v2057 = vadd.f32 %v2056, 1e-05
          %v2058 = vrsqrt.pop %v2057
          %v2059 = vmul.f32 %v2051, %v2058
          %v2060 = vld [vmem:[%s4] sm:$0x1]
          %v2062 = vlaneseq
          %v2063 = vshrl.u32 %v2062, 7
          %v2064 = vsub.s32 0, %v2063
          %v2065 = vrot.slane %v2060, %v2064
          %v2067 = vmul.f32 %v2059, %v2065
          %v2068 = vld [vmem:[%s5] sm:$0x1]
          %v2070 = vlaneseq
          %v2071 = vshrl.u32 %v2070, 7
          %v2072 = vsub.s32 0, %v2071
          %v2073 = vrot.slane %v2068, %v2072
          %v2075 = vadd.f32 %v2067, %v2073
          %2076 = vst.msk [vmem:[%s897] sm:$0xff] %vm1004, %v2075
        $region116: #{_lambda_.1} parent=107 // pred_fallthru
          _
        %s2077 = sand.u32 %s608, 1
        %s2078 = scalar_lea.sflag [#allocation8], %s2077
        %s2079 = sand.u32 %s608, 1
        %s2080 = smul.addr %s2079, 8
        %s2081 = scalar_lea.vmem [#allocation7], %s2080
        // Predicated region
        $region117: #{_lambda_.1} parent=107 // pred_check
          %p2082 = pneg %p618
        $region118: #{_lambda_.1} parent=107 // pred_check_branch
          %2084 = sbr.rel (%p2082) target = $region120
        $region119: #{_lambda_.1} parent=107 // pred_region
          %s2086 = ssub.s32 128, 128
          %2087 = vsyncadd %s2078, %s2086
          %s2088 = smul.addr %s40, 128
          %s2089 = scalar_lea.hbm %s22, %s2088
          %s2091 = sshll.u32 %s2081, 4
          %s2092 = int_to_ptr.vmem [resolvable:$true] %s2091
          %2094 = dma.vmem_to_hbm [thread:$0]  %s2092, 128, %s2089, %s2078
        $region120: #{_lambda_.1} parent=107 // pred_fallthru
          _
      $region108: #{_lambda_.1} parent=5 // pred_fallthru
        _
      %p2095 = scmp.le.s32.totalorder 2, %s31
      // Predicated region
      $region121: #{_lambda_.1} parent=5 // pred_check
        %p2096 = pneg %p2095
      $region122: #{_lambda_.1} parent=5 // pred_check_branch
        %2098 = sbr.rel (%p2096) target = $region124
      $region123: #{_lambda_.1} parent=5 // pred_region
        %s2099 = ssub.s32 %s31, 2
        // Predicated region
        $region125: #{_lambda_.1} parent=123 // pred_check
          %p2100 = pneg %p624
        $region126: #{_lambda_.1} parent=123 // pred_check_branch
          %2102 = sbr.rel (%p2100) target = $region128
        $region127: #{_lambda_.1} parent=123 // pred_region
          %s2103 = sand.u32 %s609, 1
          %s2104 = scalar_lea.sflag [#allocation8], %s2103
          %s2105 = sand.u32 %s609, 1
          %s2106 = smul.addr %s2105, 8
          %s2107 = scalar_lea.vmem [#allocation7], %s2106
          %2108 = dma.done %s2104, 128
        $region128: #{_lambda_.1} parent=123 // pred_fallthru
          _
      $region124: #{_lambda_.1} parent=5 // pred_fallthru
        _
    $region6: #{_lambda_.1} parent=1 // loop_footer
      %s35 = sadd.s32 1, %s31
    $region7: #{_lambda_.1} parent=1 // loop_footer_branch
      %30 = sbr.rel target = $region3
    $region8: #{_lambda_.1} parent=1 // loop_exit
      _
    %2109 = vsyncpa [#allocation8], 1
    %s2110 = scalar_lea.sflag [#allocation8], 1
    %2111 = vsyncpa %s2110, 1

</llo_original>
